<compile_context>
chip_gen: v6e
topology: v6e:2x2x1
jax: 0.10.0
libtpu: 0.0.40
codegen_flags: <defaults>
</compile_context>

<pallas_src>
import functools

import jax
import jax.numpy as jnp
from jax import lax
from jax.experimental import pallas as pl
from jax.experimental.pallas import tpu as pltpu


def _round_up(x: int, m: int) -> int:
    return (x + m - 1) // m * m


def _dpfm_kernel(corr_x_ref, corr_y_ref,            # VMEM (P_blk, 1) int32
                 c12_ref, cgt_ref,                  # VMEM (B, K*K) f32 (resident)
                 bce_ref,                           # VMEM (4, Nb_pad) f32 (resident)
                 fx_ref, fy_ref,                    # VMEM (N_pad, D_pad) f32 (resident)
                 out_ref,                           # VMEM (1, 8, 128) f32 per P block
                 fxn_s, fyn_s,                      # VMEM (N_pad, D_pad) bf16 scratch
                 qxn_s, qyn_s,                      # VMEM (P_blk, D_pad) bf16 scratch
                 tgt_s, mx_s, lx_s, my_s, ly_s,     # VMEM (P_blk, 1) f32 scratch
                 *, inv_t, w_fmap, w_acc, w_nce,
                 n_blk, n_valid, p_valid, p_pad, nb_valid):
    f32 = jnp.float32
    bf16 = jnp.bfloat16

    p = pl.program_id(0)
    n = pl.program_id(1)
    n_steps = pl.num_programs(1)

    p_blk = corr_x_ref.shape[0]
    n_pad = fx_ref.shape[0]

    def l2norm(v):
        v = v.astype(f32)
        ss = jnp.sum(v * v, axis=-1, keepdims=True)
        return v * lax.rsqrt(jnp.maximum(ss, 1e-24))   # == v / max(||v||_2, 1e-12)

    # ----------------- per-P-block setup (first N step) -----------------
    @pl.when(n == 0)
    def _setup():
        # Normalize the full feature sets once per P block; keep bf16 copies
        # resident in scratch so every N step just slices them (no per-step
        # re-normalization, no per-step feature DMA).
        fxn = l2norm(fx_ref[...]).astype(bf16)          # (N_pad, D_pad)
        fyn = l2norm(fy_ref[...]).astype(bf16)
        fxn_s[...] = fxn
        fyn_s[...] = fyn

        # One-hot MXU gather of correspondence rows from the normalized bf16
        # features (replaces the scalar row-at-a-time copy loop).
        col = lax.broadcasted_iota(jnp.int32, (p_blk, n_pad), 1)
        oh_x = (col == corr_x_ref[...]).astype(bf16)    # (P_blk, N_pad)
        oh_y = (col == corr_y_ref[...]).astype(bf16)
        dims_gather = (((1,), (0,)), ((), ()))
        qx = lax.dot_general(oh_x, fxn, dims_gather, preferred_element_type=f32)
        qy = lax.dot_general(oh_y, fyn, dims_gather, preferred_element_type=f32)
        qxn_s[...] = qx.astype(bf16)                    # exact: rows already bf16
        qyn_s[...] = qy.astype(bf16)

        # Target logit <qx, qy>/t is identical for both CE directions; computed
        # in f32 from the same rows that feed the MXU logits.
        tgt_s[...] = jnp.sum(qx * qy, axis=-1, keepdims=True) * inv_t

        mx_s[...] = jnp.full((p_blk, 1), -1e30, f32)
        lx_s[...] = jnp.zeros((p_blk, 1), f32)
        my_s[...] = jnp.full((p_blk, 1), -1e30, f32)
        ly_s[...] = jnp.zeros((p_blk, 1), f32)

    # ----------------- streamed (flash-style) LSE over N ----------------
    start = pl.multiple_of(n * n_blk, n_blk)
    fy_blk = fyn_s[pl.ds(start, n_blk), :]              # (n_blk, D_pad) bf16
    fx_blk = fxn_s[pl.ds(start, n_blk), :]

    dims_logits = (((1,), (1,)), ((), ()))               # contract over D
    lx = lax.dot_general(qxn_s[...], fy_blk, dims_logits,
                         preferred_element_type=f32) * inv_t    # (P_blk, n_blk)
    ly = lax.dot_general(qyn_s[...], fx_blk, dims_logits,
                         preferred_element_type=f32) * inv_t

    if n_valid != n_pad:                                 # mask padded columns
        col = lax.broadcasted_iota(jnp.int32, (p_blk, n_blk), 1) + start
        keep = col < n_valid
        lx = jnp.where(keep, lx, -1e30)
        ly = jnp.where(keep, ly, -1e30)

    # Online logsumexp update.  exp kept in f32 for accuracy; a bf16 exp
    # (z - m <= 0) is a v6e/v7x EUP lever if the kernel ever becomes EUP-bound.
    mx_new = jnp.maximum(mx_s[...], jnp.max(lx, axis=-1, keepdims=True))
    lx_s[...] = (lx_s[...] * jnp.exp(mx_s[...] - mx_new)
                 + jnp.sum(jnp.exp(lx - mx_new), axis=-1, keepdims=True))
    mx_s[...] = mx_new

    my_new = jnp.maximum(my_s[...], jnp.max(ly, axis=-1, keepdims=True))
    ly_s[...] = (ly_s[...] * jnp.exp(my_s[...] - my_new)
                 + jnp.sum(jnp.exp(ly - my_new), axis=-1, keepdims=True))
    my_s[...] = my_new

    # ----------------- finalize (last N step of this P block) -----------
    @pl.when(n == n_steps - 1)
    def _finalize():
        lse_x = mx_s[...] + jnp.log(lx_s[...])           # (P_blk, 1)
        lse_y = my_s[...] + jnp.log(ly_s[...])
        per_pair = (lse_x - tgt_s[...]) + (lse_y - tgt_s[...])
        if p_valid != p_pad:                              # mask padded pairs
            row = lax.broadcasted_iota(jnp.int32, (p_blk, 1), 0) + p * p_blk
            per_pair = jnp.where(row < p_valid, per_pair, 0.0)
        nce_val = jnp.sum(per_pair) * (w_nce / float(p_valid))

        # Frobenius: mean over batch of sum_ij (a - b)^2   (tiny; per P block)
        d = c12_ref[...] - cgt_ref[...]
        fmap_val = (jnp.sum(d * d) / f32(c12_ref.shape[0])) * w_fmap

        # Class-balanced BCE on the two overlap predictions.
        arr = bce_ref[...]                                # (4, Nb_pad)
        pred = jnp.clip(arr[0:2, :], 0.0, 1.0)            # harden against fp drift
        gt = arr[2:4, :]
        nb_pad = arr.shape[1]
        # torch.nn.BCELoss clamps log() at -100 -> finite for p in {0, 1}.
        log_p = jnp.maximum(jnp.log(pred), -100.0)
        log_1mp = jnp.maximum(jnp.log(1.0 - pred), -100.0)
        bce = -(gt * log_p + (1.0 - gt) * log_1mp)
        if nb_valid != nb_pad:
            bcol = lax.broadcasted_iota(jnp.int32, (2, nb_pad), 1)
            bkeep = bcol < nb_valid
            bce = jnp.where(bkeep, bce, 0.0)
            gt_v = jnp.where(bkeep, gt, 0.0)
        else:
            gt_v = gt
        total = f32(nb_valid)
        n_pos = jnp.sum(gt_v, axis=-1, keepdims=True)     # (2, 1)
        w_neg = n_pos / total
        weights = jnp.where(gt >= 0.5, 1.0 - w_neg, w_neg)
        plain = jnp.sum(bce, axis=-1, keepdims=True) / total
        weighted = jnp.sum(weights * bce, axis=-1, keepdims=True) / total
        degenerate = jnp.logical_or(n_pos < 0.5, n_pos > total - 0.5)
        acc_val = jnp.sum(jnp.where(degenerate, plain, weighted)) * w_acc

        # Pack [nce_partial, fmap, acc] into sublanes 0/1/2 of the block.
        subl = lax.broadcasted_iota(jnp.int32, (1, 8, 128), 1)
        tile = jnp.where(subl == 0, nce_val, 0.0)
        tile = jnp.where(subl == 1, fmap_val, tile)
        tile = jnp.where(subl == 2, acc_val, tile)
        out_ref[...] = tile.astype(f32)


def dpfm_loss(C12, C_gt, corr_x, corr_y, feat1, feat2,
              overlap_score12, overlap_score21,
              gt_partiality_mask12, gt_partiality_mask21,
              *, w_fmap=1.0, w_acc=1.0, w_nce=0.1, nce_t=0.07,
              p_block=256, n_block=512):
    f32 = jnp.float32

    B = C12.shape[0]
    feat1 = feat1.reshape(-1, feat1.shape[-1]).astype(f32)
    feat2 = feat2.reshape(-1, feat2.shape[-1]).astype(f32)
    N, D = feat1.shape
    P = int(corr_x.shape[0])

    # ---- lane/sublane-dense padded layouts ----
    D_pad = _round_up(D, 128)
    n_blk = min(n_block, _round_up(N, 128))
    N_pad = _round_up(N, n_blk)
    p_blk = min(p_block, _round_up(P, 8))
    P_pad = _round_up(P, p_blk)
    num_p = P_pad // p_blk
    num_n = N_pad // n_blk

    fx = jnp.zeros((N_pad, D_pad), f32).at[:N, :D].set(feat1)
    fy = jnp.zeros((N_pad, D_pad), f32).at[:N, :D].set(feat2)

    cx = jnp.zeros((P_pad, 1), jnp.int32).at[:P, 0].set(
        corr_x.reshape(-1).astype(jnp.int32))
    cy = jnp.zeros((P_pad, 1), jnp.int32).at[:P, 0].set(
        corr_y.reshape(-1).astype(jnp.int32))

    s12 = overlap_score12.reshape(-1).astype(f32)
    s21 = overlap_score21.reshape(-1).astype(f32)
    m12 = gt_partiality_mask12.reshape(-1).astype(f32)
    m21 = gt_partiality_mask21.reshape(-1).astype(f32)
    Nb = int(s12.shape[0])
    Nb_pad = _round_up(Nb, 128)

    def pad1(v, c):
        return jnp.pad(v, (0, Nb_pad - Nb), constant_values=c)

    bce_in = jnp.stack([pad1(s12, 0.5), pad1(s21, 0.5),
                        pad1(m12, 0.0), pad1(m21, 0.0)], axis=0)   # (4, Nb_pad)

    c12 = C12.reshape(B, -1).astype(f32)
    cgt = C_gt.reshape(B, -1).astype(f32)
    KK = c12.shape[1]

    kernel = functools.partial(
        _dpfm_kernel,
        inv_t=float(1.0 / nce_t),
        w_fmap=float(w_fmap), w_acc=float(w_acc), w_nce=float(w_nce),
        n_blk=n_blk, n_valid=N, p_valid=P, p_pad=P_pad, nb_valid=Nb)

    in_specs = [
        pl.BlockSpec((p_blk, 1), lambda pi, ni: (pi, 0)),      # corr_x
        pl.BlockSpec((p_blk, 1), lambda pi, ni: (pi, 0)),      # corr_y
        pl.BlockSpec((B, KK), lambda pi, ni: (0, 0)),          # C12 (resident)
        pl.BlockSpec((B, KK), lambda pi, ni: (0, 0)),          # C_gt (resident)
        pl.BlockSpec((4, Nb_pad), lambda pi, ni: (0, 0)),      # stacked BCE slab
        pl.BlockSpec((N_pad, D_pad), lambda pi, ni: (0, 0)),   # feat1 (resident)
        pl.BlockSpec((N_pad, D_pad), lambda pi, ni: (0, 0)),   # feat2 (resident)
    ]
    out_specs = pl.BlockSpec((1, 8, 128), lambda pi, ni: (pi, 0, 0))
    scratch = [
        pltpu.VMEM((N_pad, D_pad), jnp.bfloat16),   # normalized feat_x
        pltpu.VMEM((N_pad, D_pad), jnp.bfloat16),   # normalized feat_y
        pltpu.VMEM((p_blk, D_pad), jnp.bfloat16),   # gathered qx rows
        pltpu.VMEM((p_blk, D_pad), jnp.bfloat16),   # gathered qy rows
        pltpu.VMEM((p_blk, 1), f32),                # target logit
        pltpu.VMEM((p_blk, 1), f32),                # running max  (x dir)
        pltpu.VMEM((p_blk, 1), f32),                # running sumexp (x dir)
        pltpu.VMEM((p_blk, 1), f32),                # running max  (y dir)
        pltpu.VMEM((p_blk, 1), f32),                # running sumexp (y dir)
    ]

    # Scoped-VMEM sizing from the tile arithmetic (x2 margin, capped below
    # v7x's 64 MiB physical VMEM; never below the 32 MiB default).
    est = (2 * N_pad * D_pad * 4 * 2        # resident f32 feature inputs
           + 2 * N_pad * D_pad * 2          # bf16 normalized scratch
           + 2 * p_blk * D_pad * 2          # gathered rows
           + 2 * p_blk * N_pad * 2          # one-hot gather operands (transient)
           + p_blk * N_pad * 4              # iota for the one-hot compare
           + 2 * p_blk * n_blk * 4          # per-step logits
           + 4 * Nb_pad * 4 + 2 * B * KK * 4 + 2 * P_pad * 4
           + num_p * 8 * 128 * 4 + (1 << 20))
    vmem_limit = int(min(56 * 2**20, max(32 * 2**20, 2 * est)))

    cost = pl.CostEstimate(
        flops=int(4 * 2 * P_pad * N_pad * D_pad),          # logits + one-hot gather
        transcendentals=int(2 * P_pad * N_pad + 8 * Nb_pad),
        bytes_accessed=int(fx.size * 4 + fy.size * 4 + bce_in.size * 4
                           + 2 * B * KK * 4 + 2 * P_pad * 4
                           + num_p * 8 * 128 * 4))

    out = pl.pallas_call(
        kernel,
        grid=(num_p, num_n),
        in_specs=in_specs,
        out_specs=out_specs,
        out_shape=jax.ShapeDtypeStruct((num_p, 8, 128), f32),
        scratch_shapes=scratch,
        compiler_params=pltpu.CompilerParams(
            dimension_semantics=("parallel", "arbitrary"),
            vmem_limit_bytes=vmem_limit),
        cost_estimate=cost,
    )(cx, cy, c12, cgt, bce_in, fx, fy)

    nce_loss = jnp.sum(out[:, 0, 0])
    fmap_loss = out[0, 1, 0]
    acc_loss = out[0, 2, 0]
    return fmap_loss, acc_loss, nce_loss


def _reference(C12, C_gt, corr_x, corr_y, feat1, feat2,
               s12, s21, m12, m21,
               *, w_fmap=1.0, w_acc=1.0, w_nce=0.1, nce_t=0.07):
    """Pure-JAX f32 reference of the PyTorch forward (for the self-test)."""
    fmap = jnp.mean(jnp.sum((C12 - C_gt) ** 2, axis=(1, 2))) * w_fmap

    def wbce(p, g):
        bce = -(g * jnp.log(p) + (1.0 - g) * jnp.log(1.0 - p))
        npos = jnp.sum(g)
        tot = g.shape[0]
        wneg = npos / tot
        wts = jnp.where(g >= 0.5, 1.0 - wneg, wneg)
        deg = jnp.logical_or(npos == 0, npos == tot)
        return jnp.where(deg, jnp.mean(bce), jnp.mean(wts * bce))

    acc = (wbce(s12, m12) + wbce(s21, m21)) * w_acc

    fx = feat1.reshape(-1, feat1.shape[-1])
    fy = feat2.reshape(-1, feat2.shape[-1])
    fxn = fx / jnp.maximum(jnp.linalg.norm(fx, axis=-1, keepdims=True), 1e-12)
    fyn = fy / jnp.maximum(jnp.linalg.norm(fy, axis=-1, keepdims=True), 1e-12)
    logits = fxn @ fyn.T / nce_t
    P = corr_x.shape[0]
    lx = logits[corr_x]
    ly = logits.T[corr_y]
    loss_x = jnp.mean(jax.nn.logsumexp(lx, axis=-1) - lx[jnp.arange(P), corr_y])
    loss_y = jnp.mean(jax.nn.logsumexp(ly, axis=-1) - ly[jnp.arange(P), corr_x])
    nce = (loss_x + loss_y) * w_nce
    return fmap, acc, nce


if __name__ == "__main__":
    key = jax.random.PRNGKey(0)
    ks = jax.random.split(key, 10)

    B, K = 2, 16           # functional maps: (B, K, K)
    N, D, P = 128, 32, 16  # N points, D-dim features, P correspondence pairs

    C12 = jax.random.normal(ks[0], (B, K, K), jnp.float32)
    C_gt = jax.random.normal(ks[1], (B, K, K), jnp.float32)
    corr_x = jax.random.randint(ks[2], (P,), 0, N, jnp.int32)
    corr_y = jax.random.randint(ks[3], (P,), 0, N, jnp.int32)
    feat1 = jax.random.normal(ks[4], (1, N, D), jnp.float32)
    feat2 = jax.random.normal(ks[5], (1, N, D), jnp.float32)
    overlap_score12 = jax.nn.sigmoid(jax.random.normal(ks[6], (N,), jnp.float32))
    overlap_score21 = jax.nn.sigmoid(jax.random.normal(ks[7], (N,), jnp.float32))
    gt_partiality_mask12 = (jax.random.uniform(ks[8], (N,)) > 0.5).astype(jnp.float32)
    gt_partiality_mask21 = (jax.random.uniform(ks[9], (N,)) > 0.5).astype(jnp.float32)

    fmap_loss, acc_loss, nce_loss = jax.jit(dpfm_loss)(
        C12, C_gt, corr_x, corr_y, feat1, feat2,
        overlap_score12, overlap_score21,
        gt_partiality_mask12, gt_partiality_mask21)
    jax.block_until_ready((fmap_loss, acc_loss, nce_loss))

    assert bool(jnp.isfinite(fmap_loss))
    assert bool(jnp.isfinite(acc_loss))
    assert bool(jnp.isfinite(nce_loss))

    r_fmap, r_acc, r_nce = _reference(
        C12, C_gt, corr_x, corr_y, feat1, feat2,
        overlap_score12, overlap_score21,
        gt_partiality_mask12, gt_partiality_mask21)
    assert bool(jnp.allclose(fmap_loss, r_fmap, rtol=5e-2, atol=5e-2))
    assert bool(jnp.allclose(acc_loss, r_acc, rtol=5e-2, atol=5e-2))
    assert bool(jnp.allclose(nce_loss, r_nce, rtol=5e-2, atol=5e-2))

    print("KERNEL_OK")
</pallas_src>

<mosaic_0001>
module attributes {stable_mosaic.version = 11 : i64} {
  func.func @_dpfm_kernel(%arg0: i32, %arg1: i32, %arg2: memref<16x1xi32, #tpu.memory_space<vmem>>, %arg3: memref<16x1xi32, #tpu.memory_space<vmem>>, %arg4: memref<2x256xf32, #tpu.memory_space<vmem>>, %arg5: memref<2x256xf32, #tpu.memory_space<vmem>>, %arg6: memref<4x128xf32, #tpu.memory_space<vmem>>, %arg7: memref<128x128xf32, #tpu.memory_space<vmem>>, %arg8: memref<128x128xf32, #tpu.memory_space<vmem>>, %arg9: memref<1x8x128xf32, #tpu.memory_space<vmem>>, %arg10: memref<128x128xbf16, #tpu.memory_space<vmem>>, %arg11: memref<128x128xbf16, #tpu.memory_space<vmem>>, %arg12: memref<16x128xbf16, #tpu.memory_space<vmem>>, %arg13: memref<16x128xbf16, #tpu.memory_space<vmem>>, %arg14: memref<16x1xf32, #tpu.memory_space<vmem>>, %arg15: memref<16x1xf32, #tpu.memory_space<vmem>>, %arg16: memref<16x1xf32, #tpu.memory_space<vmem>>, %arg17: memref<16x1xf32, #tpu.memory_space<vmem>>, %arg18: memref<16x1xf32, #tpu.memory_space<vmem>>) attributes {dimension_semantics = [#tpu.dimension_semantics<parallel>, #tpu.dimension_semantics<arbitrary>], iteration_bounds = array<i64: 1, 1>, scalar_prefetch = 0 : i64, scratch_operands = 9 : i64, tpu.core_type = #tpu.core_type<tc>, window_params = [{transform_indices = @transform_0, window_bounds = array<i64: 16, 1>}, {transform_indices = @transform_1, window_bounds = array<i64: 16, 1>}, {pipeline_mode = #tpu.pipeline_mode<synchronous>, transform_indices = @transform_2, window_bounds = array<i64: 2, 256>}, {pipeline_mode = #tpu.pipeline_mode<synchronous>, transform_indices = @transform_3, window_bounds = array<i64: 2, 256>}, {pipeline_mode = #tpu.pipeline_mode<synchronous>, transform_indices = @transform_4, window_bounds = array<i64: 4, 128>}, {pipeline_mode = #tpu.pipeline_mode<synchronous>, transform_indices = @transform_5, window_bounds = array<i64: 128, 128>}, {pipeline_mode = #tpu.pipeline_mode<synchronous>, transform_indices = @transform_6, window_bounds = array<i64: 128, 128>}, {transform_indices = @transform_7, window_bounds = array<i64: 1, 8, 128>}]} {
    %c0_i32 = arith.constant 0 : i32
    %0 = arith.cmpi eq, %arg1, %c0_i32 : i32
    %1 = arith.extui %0 : i1 to i32
    %c0_i32_0 = arith.constant 0 : i32
    %2 = arith.cmpi ne, %1, %c0_i32_0 : i32
    scf.if %2 {
      %c0_35 = arith.constant 0 : index
      %c0_36 = arith.constant 0 : index
      %54 = vector.load %arg7[%c0_35, %c0_36] : memref<128x128xf32, #tpu.memory_space<vmem>>, vector<128x128xf32>
      %55 = arith.mulf %54, %54 : vector<128x128xf32>
      %cst_37 = arith.constant dense<0.000000e+00> : vector<128xf32>
      %56 = vector.multi_reduction <add>, %55, %cst_37 [1] : vector<128x128xf32> to vector<128xf32>
      %57 = vector.shape_cast %56 : vector<128xf32> to vector<128x1xf32>
      %cst_38 = arith.constant 1.000000e-24 : f32
      %58 = vector.broadcast %cst_38 : f32 to vector<128x1xf32>
      %59 = arith.maximumf %57, %58 : vector<128x1xf32>
      %60 = math.rsqrt %59 : vector<128x1xf32>
      %61 = vector.broadcast %60 : vector<128x1xf32> to vector<128x128xf32>
      %62 = arith.mulf %54, %61 : vector<128x128xf32>
      %63 = arith.truncf %62 : vector<128x128xf32> to vector<128x128xbf16>
      %c0_39 = arith.constant 0 : index
      %c0_40 = arith.constant 0 : index
      %64 = vector.load %arg8[%c0_39, %c0_40] : memref<128x128xf32, #tpu.memory_space<vmem>>, vector<128x128xf32>
      %65 = arith.mulf %64, %64 : vector<128x128xf32>
      %cst_41 = arith.constant dense<0.000000e+00> : vector<128xf32>
      %66 = vector.multi_reduction <add>, %65, %cst_41 [1] : vector<128x128xf32> to vector<128xf32>
      %67 = vector.shape_cast %66 : vector<128xf32> to vector<128x1xf32>
      %cst_42 = arith.constant 1.000000e-24 : f32
      %68 = vector.broadcast %cst_42 : f32 to vector<128x1xf32>
      %69 = arith.maximumf %67, %68 : vector<128x1xf32>
      %70 = math.rsqrt %69 : vector<128x1xf32>
      %71 = vector.broadcast %70 : vector<128x1xf32> to vector<128x128xf32>
      %72 = arith.mulf %64, %71 : vector<128x128xf32>
      %73 = arith.truncf %72 : vector<128x128xf32> to vector<128x128xbf16>
      %c0_43 = arith.constant 0 : index
      %c0_44 = arith.constant 0 : index
      %74 = vector.load %arg10[%c0_43, %c0_44] : memref<128x128xbf16, #tpu.memory_space<vmem>>, vector<128x128xbf16>
      tpu.vector_store %arg10[%c0_43, %c0_44], %63 {strides = array<i32>} : memref<128x128xbf16, #tpu.memory_space<vmem>>, vector<128x128xbf16>,
      %c0_45 = arith.constant 0 : index
      %c0_46 = arith.constant 0 : index
      %75 = vector.load %arg11[%c0_45, %c0_46] : memref<128x128xbf16, #tpu.memory_space<vmem>>, vector<128x128xbf16>
      tpu.vector_store %arg11[%c0_45, %c0_46], %73 {strides = array<i32>} : memref<128x128xbf16, #tpu.memory_space<vmem>>, vector<128x128xbf16>,
      %76 = tpu.iota {dimensions = array<i32: 1>} : vector<16x128xi32>
      %c0_47 = arith.constant 0 : index
      %c0_48 = arith.constant 0 : index
      %77 = vector.load %arg2[%c0_47, %c0_48] : memref<16x1xi32, #tpu.memory_space<vmem>>, vector<16x1xi32>
      %78 = vector.broadcast %77 : vector<16x1xi32> to vector<16x128xi32>
      %79 = arith.cmpi eq, %76, %78 : vector<16x128xi32>
      %80 = arith.extui %79 : vector<16x128xi1> to vector<16x128xi32>
      %81 = arith.sitofp %80 : vector<16x128xi32> to vector<16x128xf32>
      %82 = arith.truncf %81 : vector<16x128xf32> to vector<16x128xbf16>
      %c0_49 = arith.constant 0 : index
      %c0_50 = arith.constant 0 : index
      %83 = vector.load %arg3[%c0_49, %c0_50] : memref<16x1xi32, #tpu.memory_space<vmem>>, vector<16x1xi32>
      %84 = vector.broadcast %83 : vector<16x1xi32> to vector<16x128xi32>
      %85 = arith.cmpi eq, %76, %84 : vector<16x128xi32>
      %86 = arith.extui %85 : vector<16x128xi1> to vector<16x128xi32>
      %87 = arith.sitofp %86 : vector<16x128xi32> to vector<16x128xf32>
      %88 = arith.truncf %87 : vector<16x128xf32> to vector<16x128xbf16>
      %cst_51 = arith.constant dense<0.000000e+00> : vector<16x128xf32>
      %89 = tpu.matmul %82, %63, %cst_51 {dimension_numbers = #tpu.dot_dimension_numbers<[1], [0], [0], [1], [0, 0, 1, 1], [], []>} : vector<16x128xbf16>, vector<128x128xbf16>, vector<16x128xf32> -> vector<16x128xf32>
      %cst_52 = arith.constant dense<0.000000e+00> : vector<16x128xf32>
      %90 = tpu.matmul %88, %73, %cst_52 {dimension_numbers = #tpu.dot_dimension_numbers<[1], [0], [0], [1], [0, 0, 1, 1], [], []>} : vector<16x128xbf16>, vector<128x128xbf16>, vector<16x128xf32> -> vector<16x128xf32>
      %91 = arith.truncf %89 : vector<16x128xf32> to vector<16x128xbf16>
      %c0_53 = arith.constant 0 : index
      %c0_54 = arith.constant 0 : index
      %92 = vector.load %arg12[%c0_53, %c0_54] : memref<16x128xbf16, #tpu.memory_space<vmem>>, vector<16x128xbf16>
      tpu.vector_store %arg12[%c0_53, %c0_54], %91 {strides = array<i32>} : memref<16x128xbf16, #tpu.memory_space<vmem>>, vector<16x128xbf16>,
      %93 = arith.truncf %90 : vector<16x128xf32> to vector<16x128xbf16>
      %c0_55 = arith.constant 0 : index
      %c0_56 = arith.constant 0 : index
      %94 = vector.load %arg13[%c0_55, %c0_56] : memref<16x128xbf16, #tpu.memory_space<vmem>>, vector<16x128xbf16>
      tpu.vector_store %arg13[%c0_55, %c0_56], %93 {strides = array<i32>} : memref<16x128xbf16, #tpu.memory_space<vmem>>, vector<16x128xbf16>,
      %95 = arith.mulf %89, %90 : vector<16x128xf32>
      %cst_57 = arith.constant dense<0.000000e+00> : vector<16xf32>
      %96 = vector.multi_reduction <add>, %95, %cst_57 [1] : vector<16x128xf32> to vector<16xf32>
      %97 = vector.shape_cast %96 : vector<16xf32> to vector<16x1xf32>
      %cst_58 = arith.constant 14.2857141 : f32
      %98 = vector.broadcast %cst_58 : f32 to vector<16x1xf32>
      %99 = arith.mulf %97, %98 : vector<16x1xf32>
      %c0_59 = arith.constant 0 : index
      %c0_60 = arith.constant 0 : index
      %100 = vector.load %arg14[%c0_59, %c0_60] : memref<16x1xf32, #tpu.memory_space<vmem>>, vector<16x1xf32>
      tpu.vector_store %arg14[%c0_59, %c0_60], %99 {strides = array<i32>} : memref<16x1xf32, #tpu.memory_space<vmem>>, vector<16x1xf32>,
      %cst_61 = arith.constant -1.000000e+30 : f32
      %101 = vector.broadcast %cst_61 : f32 to vector<16x1xf32>
      %c0_62 = arith.constant 0 : index
      %c0_63 = arith.constant 0 : index
      %102 = vector.load %arg15[%c0_62, %c0_63] : memref<16x1xf32, #tpu.memory_space<vmem>>, vector<16x1xf32>
      tpu.vector_store %arg15[%c0_62, %c0_63], %101 {strides = array<i32>} : memref<16x1xf32, #tpu.memory_space<vmem>>, vector<16x1xf32>,
      %cst_64 = arith.constant 0.000000e+00 : f32
      %103 = vector.broadcast %cst_64 : f32 to vector<16x1xf32>
      %c0_65 = arith.constant 0 : index
      %c0_66 = arith.constant 0 : index
      %104 = vector.load %arg16[%c0_65, %c0_66] : memref<16x1xf32, #tpu.memory_space<vmem>>, vector<16x1xf32>
      tpu.vector_store %arg16[%c0_65, %c0_66], %103 {strides = array<i32>} : memref<16x1xf32, #tpu.memory_space<vmem>>, vector<16x1xf32>,
      %cst_67 = arith.constant -1.000000e+30 : f32
      %105 = vector.broadcast %cst_67 : f32 to vector<16x1xf32>
      %c0_68 = arith.constant 0 : index
      %c0_69 = arith.constant 0 : index
      %106 = vector.load %arg17[%c0_68, %c0_69] : memref<16x1xf32, #tpu.memory_space<vmem>>, vector<16x1xf32>
      tpu.vector_store %arg17[%c0_68, %c0_69], %105 {strides = array<i32>} : memref<16x1xf32, #tpu.memory_space<vmem>>, vector<16x1xf32>,
      %cst_70 = arith.constant 0.000000e+00 : f32
      %107 = vector.broadcast %cst_70 : f32 to vector<16x1xf32>
      %c0_71 = arith.constant 0 : index
      %c0_72 = arith.constant 0 : index
      %108 = vector.load %arg18[%c0_71, %c0_72] : memref<16x1xf32, #tpu.memory_space<vmem>>, vector<16x1xf32>
      tpu.vector_store %arg18[%c0_71, %c0_72], %107 {strides = array<i32>} : memref<16x1xf32, #tpu.memory_space<vmem>>, vector<16x1xf32>,
    } else {
    }
    %c128_i32 = arith.constant 128 : i32
    %3 = arith.muli %arg1, %c128_i32 : i32
    %4 = tpu.assume_multiple %3, 128 : i32
    %5 = arith.index_cast %4 : i32 to index
    %c0 = arith.constant 0 : index
    %6 = vector.load %arg11[%5, %c0] : memref<128x128xbf16, #tpu.memory_space<vmem>>, vector<128x128xbf16>
    %7 = arith.index_cast %4 : i32 to index
    %c0_1 = arith.constant 0 : index
    %8 = vector.load %arg10[%7, %c0_1] : memref<128x128xbf16, #tpu.memory_space<vmem>>, vector<128x128xbf16>
    %c0_2 = arith.constant 0 : index
    %c0_3 = arith.constant 0 : index
    %9 = vector.load %arg12[%c0_2, %c0_3] : memref<16x128xbf16, #tpu.memory_space<vmem>>, vector<16x128xbf16>
    %cst = arith.constant dense<0.000000e+00> : vector<16x128xf32>
    %10 = tpu.matmul %9, %6, %cst {dimension_numbers = #tpu.dot_dimension_numbers<[1], [1], [0], [0], [0, 0, 1, 0], [], []>} : vector<16x128xbf16>, vector<128x128xbf16>, vector<16x128xf32> -> vector<16x128xf32>
    %cst_4 = arith.constant 14.2857141 : f32
    %11 = vector.broadcast %cst_4 : f32 to vector<16x128xf32>
    %12 = arith.mulf %10, %11 : vector<16x128xf32>
    %c0_5 = arith.constant 0 : index
    %c0_6 = arith.constant 0 : index
    %13 = vector.load %arg13[%c0_5, %c0_6] : memref<16x128xbf16, #tpu.memory_space<vmem>>, vector<16x128xbf16>
    %cst_7 = arith.constant dense<0.000000e+00> : vector<16x128xf32>
    %14 = tpu.matmul %13, %8, %cst_7 {dimension_numbers = #tpu.dot_dimension_numbers<[1], [1], [0], [0], [0, 0, 1, 0], [], []>} : vector<16x128xbf16>, vector<128x128xbf16>, vector<16x128xf32> -> vector<16x128xf32>
    %cst_8 = arith.constant 14.2857141 : f32
    %15 = vector.broadcast %cst_8 : f32 to vector<16x128xf32>
    %16 = arith.mulf %14, %15 : vector<16x128xf32>
    %c0_9 = arith.constant 0 : index
    %c0_10 = arith.constant 0 : index
    %17 = vector.load %arg15[%c0_9, %c0_10] : memref<16x1xf32, #tpu.memory_space<vmem>>, vector<16x1xf32>
    %cst_11 = arith.constant dense<0xFF800000> : vector<16xf32>
    %18 = vector.multi_reduction <maximumf>, %12, %cst_11 [1] : vector<16x128xf32> to vector<16xf32>
    %19 = vector.shape_cast %18 : vector<16xf32> to vector<16x1xf32>
    %20 = arith.maximumf %17, %19 : vector<16x1xf32>
    %c0_12 = arith.constant 0 : index
    %c0_13 = arith.constant 0 : index
    %21 = vector.load %arg16[%c0_12, %c0_13] : memref<16x1xf32, #tpu.memory_space<vmem>>, vector<16x1xf32>
    %c0_14 = arith.constant 0 : index
    %c0_15 = arith.constant 0 : index
    %22 = vector.load %arg15[%c0_14, %c0_15] : memref<16x1xf32, #tpu.memory_space<vmem>>, vector<16x1xf32>
    %23 = arith.subf %22, %20 : vector<16x1xf32>
    %24 = math.exp %23 : vector<16x1xf32>
    %25 = arith.mulf %21, %24 : vector<16x1xf32>
    %26 = vector.broadcast %20 : vector<16x1xf32> to vector<16x128xf32>
    %27 = arith.subf %12, %26 : vector<16x128xf32>
    %28 = math.exp %27 : vector<16x128xf32>
    %cst_16 = arith.constant dense<0.000000e+00> : vector<16xf32>
    %29 = vector.multi_reduction <add>, %28, %cst_16 [1] : vector<16x128xf32> to vector<16xf32>
    %30 = vector.shape_cast %29 : vector<16xf32> to vector<16x1xf32>
    %31 = arith.addf %25, %30 : vector<16x1xf32>
    %c0_17 = arith.constant 0 : index
    %c0_18 = arith.constant 0 : index
    %32 = vector.load %arg16[%c0_17, %c0_18] : memref<16x1xf32, #tpu.memory_space<vmem>>, vector<16x1xf32>
    tpu.vector_store %arg16[%c0_17, %c0_18], %31 {strides = array<i32>} : memref<16x1xf32, #tpu.memory_space<vmem>>, vector<16x1xf32>,
    %c0_19 = arith.constant 0 : index
    %c0_20 = arith.constant 0 : index
    %33 = vector.load %arg15[%c0_19, %c0_20] : memref<16x1xf32, #tpu.memory_space<vmem>>, vector<16x1xf32>
    tpu.vector_store %arg15[%c0_19, %c0_20], %20 {strides = array<i32>} : memref<16x1xf32, #tpu.memory_space<vmem>>, vector<16x1xf32>,
    %c0_21 = arith.constant 0 : index
    %c0_22 = arith.constant 0 : index
    %34 = vector.load %arg17[%c0_21, %c0_22] : memref<16x1xf32, #tpu.memory_space<vmem>>, vector<16x1xf32>
    %cst_23 = arith.constant dense<0xFF800000> : vector<16xf32>
    %35 = vector.multi_reduction <maximumf>, %16, %cst_23 [1] : vector<16x128xf32> to vector<16xf32>
    %36 = vector.shape_cast %35 : vector<16xf32> to vector<16x1xf32>
    %37 = arith.maximumf %34, %36 : vector<16x1xf32>
    %c0_24 = arith.constant 0 : index
    %c0_25 = arith.constant 0 : index
    %38 = vector.load %arg18[%c0_24, %c0_25] : memref<16x1xf32, #tpu.memory_space<vmem>>, vector<16x1xf32>
    %c0_26 = arith.constant 0 : index
    %c0_27 = arith.constant 0 : index
    %39 = vector.load %arg17[%c0_26, %c0_27] : memref<16x1xf32, #tpu.memory_space<vmem>>, vector<16x1xf32>
    %40 = arith.subf %39, %37 : vector<16x1xf32>
    %41 = math.exp %40 : vector<16x1xf32>
    %42 = arith.mulf %38, %41 : vector<16x1xf32>
    %43 = vector.broadcast %37 : vector<16x1xf32> to vector<16x128xf32>
    %44 = arith.subf %16, %43 : vector<16x128xf32>
    %45 = math.exp %44 : vector<16x128xf32>
    %cst_28 = arith.constant dense<0.000000e+00> : vector<16xf32>
    %46 = vector.multi_reduction <add>, %45, %cst_28 [1] : vector<16x128xf32> to vector<16xf32>
    %47 = vector.shape_cast %46 : vector<16xf32> to vector<16x1xf32>
    %48 = arith.addf %42, %47 : vector<16x1xf32>
    %c0_29 = arith.constant 0 : index
    %c0_30 = arith.constant 0 : index
    %49 = vector.load %arg18[%c0_29, %c0_30] : memref<16x1xf32, #tpu.memory_space<vmem>>, vector<16x1xf32>
    tpu.vector_store %arg18[%c0_29, %c0_30], %48 {strides = array<i32>} : memref<16x1xf32, #tpu.memory_space<vmem>>, vector<16x1xf32>,
    %c0_31 = arith.constant 0 : index
    %c0_32 = arith.constant 0 : index
    %50 = vector.load %arg17[%c0_31, %c0_32] : memref<16x1xf32, #tpu.memory_space<vmem>>, vector<16x1xf32>
    tpu.vector_store %arg17[%c0_31, %c0_32], %37 {strides = array<i32>} : memref<16x1xf32, #tpu.memory_space<vmem>>, vector<16x1xf32>,
    %c0_i32_33 = arith.constant 0 : i32
    %51 = arith.cmpi eq, %arg1, %c0_i32_33 : i32
    %52 = arith.extui %51 : i1 to i32
    %c0_i32_34 = arith.constant 0 : i32
    %53 = arith.cmpi ne, %52, %c0_i32_34 : i32
    scf.if %53 {
      %c0_35 = arith.constant 0 : index
      %c0_36 = arith.constant 0 : index
      %54 = vector.load %arg15[%c0_35, %c0_36] : memref<16x1xf32, #tpu.memory_space<vmem>>, vector<16x1xf32>
      %c0_37 = arith.constant 0 : index
      %c0_38 = arith.constant 0 : index
      %55 = vector.load %arg16[%c0_37, %c0_38] : memref<16x1xf32, #tpu.memory_space<vmem>>, vector<16x1xf32>
      %56 = math.log %55 : vector<16x1xf32>
      %57 = arith.addf %54, %56 : vector<16x1xf32>
      %c0_39 = arith.constant 0 : index
      %c0_40 = arith.constant 0 : index
      %58 = vector.load %arg17[%c0_39, %c0_40] : memref<16x1xf32, #tpu.memory_space<vmem>>, vector<16x1xf32>
      %c0_41 = arith.constant 0 : index
      %c0_42 = arith.constant 0 : index
      %59 = vector.load %arg18[%c0_41, %c0_42] : memref<16x1xf32, #tpu.memory_space<vmem>>, vector<16x1xf32>
      %60 = math.log %59 : vector<16x1xf32>
      %61 = arith.addf %58, %60 : vector<16x1xf32>
      %c0_43 = arith.constant 0 : index
      %c0_44 = arith.constant 0 : index
      %62 = vector.load %arg14[%c0_43, %c0_44] : memref<16x1xf32, #tpu.memory_space<vmem>>, vector<16x1xf32>
      %63 = arith.subf %57, %62 : vector<16x1xf32>
      %c0_45 = arith.constant 0 : index
      %c0_46 = arith.constant 0 : index
      %64 = vector.load %arg14[%c0_45, %c0_46] : memref<16x1xf32, #tpu.memory_space<vmem>>, vector<16x1xf32>
      %65 = arith.subf %61, %64 : vector<16x1xf32>
      %66 = arith.addf %63, %65 : vector<16x1xf32>
      %67 = vector.shape_cast %66 : vector<16x1xf32> to vector<1x16x1xf32>
      %cst_47 = arith.constant dense<0.000000e+00> : vector<1xf32>
      %68 = vector.multi_reduction <add>, %67, %cst_47 [1, 2] : vector<1x16x1xf32> to vector<1xf32>
      %69 = vector.shape_cast %68 : vector<1xf32> to vector<1x1x1xf32>
      %70 = vector.extract %69[0, 0, 0] : f32 from vector<1x1x1xf32>
      %cst_48 = arith.constant 6.250000e-03 : f32
      %71 = arith.mulf %70, %cst_48 : f32
      %c0_49 = arith.constant 0 : index
      %c0_50 = arith.constant 0 : index
      %72 = vector.load %arg4[%c0_49, %c0_50] : memref<2x256xf32, #tpu.memory_space<vmem>>, vector<2x256xf32>
      %c0_51 = arith.constant 0 : index
      %c0_52 = arith.constant 0 : index
      %73 = vector.load %arg5[%c0_51, %c0_52] : memref<2x256xf32, #tpu.memory_space<vmem>>, vector<2x256xf32>
      %74 = arith.subf %72, %73 : vector<2x256xf32>
      %75 = arith.mulf %74, %74 : vector<2x256xf32>
      %76 = vector.shape_cast %75 : vector<2x256xf32> to vector<1x2x256xf32>
      %cst_53 = arith.constant dense<0.000000e+00> : vector<1xf32>
      %77 = vector.multi_reduction <add>, %76, %cst_53 [1, 2] : vector<1x2x256xf32> to vector<1xf32>
      %78 = vector.shape_cast %77 : vector<1xf32> to vector<1x1x1xf32>
      %79 = vector.extract %78[0, 0, 0] : f32 from vector<1x1x1xf32>
      %cst_54 = arith.constant 2.000000e+00 : f32
      %80 = arith.divf %79, %cst_54 : f32
      %cst_55 = arith.constant 1.000000e+00 : f32
      %81 = arith.mulf %80, %cst_55 : f32
      %c0_56 = arith.constant 0 : index
      %c0_57 = arith.constant 0 : index
      %82 = vector.load %arg6[%c0_56, %c0_57] : memref<4x128xf32, #tpu.memory_space<vmem>>, vector<4x128xf32>
      %83 = vector.extract_strided_slice %82 {offsets = [0, 0], sizes = [2, 128], strides = [1, 1]} : vector<4x128xf32> to vector<2x128xf32>
      %cst_58 = arith.constant 0.000000e+00 : f32
      %cst_59 = arith.constant 1.000000e+00 : f32
      %84 = vector.broadcast %cst_58 : f32 to vector<2x128xf32>
      %85 = arith.maximumf %84, %83 : vector<2x128xf32>
      %86 = vector.broadcast %cst_59 : f32 to vector<2x128xf32>
      %87 = arith.minimumf %86, %85 : vector<2x128xf32>
      %88 = vector.extract_strided_slice %82 {offsets = [2, 0], sizes = [2, 128], strides = [1, 1]} : vector<4x128xf32> to vector<2x128xf32>
      %89 = math.log %87 : vector<2x128xf32>
      %cst_60 = arith.constant -1.000000e+02 : f32
      %90 = vector.broadcast %cst_60 : f32 to vector<2x128xf32>
      %91 = arith.maximumf %89, %90 : vector<2x128xf32>
      %cst_61 = arith.constant 1.000000e+00 : f32
      %92 = vector.broadcast %cst_61 : f32 to vector<2x128xf32>
      %93 = arith.subf %92, %87 : vector<2x128xf32>
      %94 = math.log %93 : vector<2x128xf32>
      %cst_62 = arith.constant -1.000000e+02 : f32
      %95 = vector.broadcast %cst_62 : f32 to vector<2x128xf32>
      %96 = arith.maximumf %94, %95 : vector<2x128xf32>
      %97 = arith.mulf %88, %91 : vector<2x128xf32>
      %cst_63 = arith.constant 1.000000e+00 : f32
      %98 = vector.broadcast %cst_63 : f32 to vector<2x128xf32>
      %99 = arith.subf %98, %88 : vector<2x128xf32>
      %100 = arith.mulf %99, %96 : vector<2x128xf32>
      %101 = arith.addf %97, %100 : vector<2x128xf32>
      %cst_64 = arith.constant 0.000000e+00 : f32
      %102 = vector.broadcast %cst_64 : f32 to vector<2x128xf32>
      %103 = arith.subf %102, %101 : vector<2x128xf32>
      %cst_65 = arith.constant dense<0.000000e+00> : vector<2xf32>
      %104 = vector.multi_reduction <add>, %88, %cst_65 [1] : vector<2x128xf32> to vector<2xf32>
      %105 = vector.shape_cast %104 : vector<2xf32> to vector<2x1xf32>
      %cst_66 = arith.constant 1.280000e+02 : f32
      %106 = vector.broadcast %cst_66 : f32 to vector<2x1xf32>
      %107 = arith.divf %105, %106 : vector<2x1xf32>
      %cst_67 = arith.constant 5.000000e-01 : f32
      %108 = vector.broadcast %cst_67 : f32 to vector<2x128xf32>
      %109 = arith.cmpf oge, %88, %108 : vector<2x128xf32>
      %cst_68 = arith.constant 1.000000e+00 : f32
      %110 = vector.broadcast %cst_68 : f32 to vector<2x1xf32>
      %111 = arith.subf %110, %107 : vector<2x1xf32>
      %112 = vector.shape_cast %111 : vector<2x1xf32> to vector<2x1xf32>
      %113 = vector.broadcast %112 : vector<2x1xf32> to vector<2x128xf32>
      %114 = vector.shape_cast %107 : vector<2x1xf32> to vector<2x1xf32>
      %115 = vector.broadcast %114 : vector<2x1xf32> to vector<2x128xf32>
      %116 = arith.select %109, %113, %115 : vector<2x128xi1>, vector<2x128xf32>
      %cst_69 = arith.constant dense<0.000000e+00> : vector<2xf32>
      %117 = vector.multi_reduction <add>, %103, %cst_69 [1] : vector<2x128xf32> to vector<2xf32>
      %118 = vector.shape_cast %117 : vector<2xf32> to vector<2x1xf32>
      %cst_70 = arith.constant 1.280000e+02 : f32
      %119 = vector.broadcast %cst_70 : f32 to vector<2x1xf32>
      %120 = arith.divf %118, %119 : vector<2x1xf32>
      %121 = arith.mulf %116, %103 : vector<2x128xf32>
      %cst_71 = arith.constant dense<0.000000e+00> : vector<2xf32>
      %122 = vector.multi_reduction <add>, %121, %cst_71 [1] : vector<2x128xf32> to vector<2xf32>
      %123 = vector.shape_cast %122 : vector<2xf32> to vector<2x1xf32>
      %cst_72 = arith.constant 1.280000e+02 : f32
      %124 = vector.broadcast %cst_72 : f32 to vector<2x1xf32>
      %125 = arith.divf %123, %124 : vector<2x1xf32>
      %cst_73 = arith.constant 5.000000e-01 : f32
      %126 = vector.broadcast %cst_73 : f32 to vector<2x1xf32>
      %127 = arith.cmpf olt, %105, %126 : vector<2x1xf32>
      %cst_74 = arith.constant 1.280000e+02 : f32
      %cst_75 = arith.constant 5.000000e-01 : f32
      %128 = arith.subf %cst_74, %cst_75 : f32
      %129 = vector.broadcast %128 : f32 to vector<2x1xf32>
      %130 = arith.cmpf ogt, %105, %129 : vector<2x1xf32>
      %131 = arith.ori %127, %130 : vector<2x1xi1>
      %132 = arith.select %131, %120, %125 : vector<2x1xi1>, vector<2x1xf32>
      %133 = vector.shape_cast %132 : vector<2x1xf32> to vector<1x2x1xf32>
      %cst_76 = arith.constant dense<0.000000e+00> : vector<1xf32>
      %134 = vector.multi_reduction <add>, %133, %cst_76 [1, 2] : vector<1x2x1xf32> to vector<1xf32>
      %135 = vector.shape_cast %134 : vector<1xf32> to vector<1x1x1xf32>
      %136 = vector.extract %135[0, 0, 0] : f32 from vector<1x1x1xf32>
      %cst_77 = arith.constant 1.000000e+00 : f32
      %137 = arith.mulf %136, %cst_77 : f32
      %138 = tpu.iota {dimensions = array<i32: 1>} : vector<1x8x128xi32>
      %c0_i32_78 = arith.constant 0 : i32
      %139 = vector.broadcast %c0_i32_78 : i32 to vector<1x8x128xi32>
      %140 = arith.cmpi eq, %138, %139 : vector<1x8x128xi32>
      %cst_79 = arith.constant 0.000000e+00 : f32
      %141 = vector.broadcast %71 : f32 to vector<1x8x128xf32>
      %142 = vector.broadcast %cst_79 : f32 to vector<1x8x128xf32>
      %143 = arith.select %140, %141, %142 : vector<1x8x128xi1>, vector<1x8x128xf32>
      %c1_i32 = arith.constant 1 : i32
      %144 = vector.broadcast %c1_i32 : i32 to vector<1x8x128xi32>
      %145 = arith.cmpi eq, %138, %144 : vector<1x8x128xi32>
      %146 = vector.broadcast %81 : f32 to vector<1x8x128xf32>
      %147 = arith.select %145, %146, %143 : vector<1x8x128xi1>, vector<1x8x128xf32>
      %c2_i32 = arith.constant 2 : i32
      %148 = vector.broadcast %c2_i32 : i32 to vector<1x8x128xi32>
      %149 = arith.cmpi eq, %138, %148 : vector<1x8x128xi32>
      %150 = vector.broadcast %137 : f32 to vector<1x8x128xf32>
      %151 = arith.select %149, %150, %147 : vector<1x8x128xi1>, vector<1x8x128xf32>
      %c0_80 = arith.constant 0 : index
      %c0_81 = arith.constant 0 : index
      %c0_82 = arith.constant 0 : index
      %152 = vector.load %arg9[%c0_80, %c0_81, %c0_82] : memref<1x8x128xf32, #tpu.memory_space<vmem>>, vector<1x8x128xf32>
      tpu.vector_store %arg9[%c0_80, %c0_81, %c0_82], %151 {strides = array<i32>} : memref<1x8x128xf32, #tpu.memory_space<vmem>>, vector<1x8x128xf32>,
    } else {
    }
    return
  }
  func.func @transform_0(%arg0: i32, %arg1: i32) -> (i32, i32) {
    %c0_i32 = arith.constant 0 : i32
    %c0_i32_0 = arith.constant 0 : i32
    return %arg0, %c0_i32 : i32, i32
  }
  func.func @transform_1(%arg0: i32, %arg1: i32) -> (i32, i32) {
    %c0_i32 = arith.constant 0 : i32
    %c0_i32_0 = arith.constant 0 : i32
    return %arg0, %c0_i32 : i32, i32
  }
  func.func @transform_2(%arg0: i32, %arg1: i32) -> (i32, i32) {
    %c0_i32 = arith.constant 0 : i32
    %c0_i32_0 = arith.constant 0 : i32
    %c0_i32_1 = arith.constant 0 : i32
    return %c0_i32, %c0_i32_0 : i32, i32
  }
  func.func @transform_3(%arg0: i32, %arg1: i32) -> (i32, i32) {
    %c0_i32 = arith.constant 0 : i32
    %c0_i32_0 = arith.constant 0 : i32
    %c0_i32_1 = arith.constant 0 : i32
    return %c0_i32, %c0_i32_0 : i32, i32
  }
  func.func @transform_4(%arg0: i32, %arg1: i32) -> (i32, i32) {
    %c0_i32 = arith.constant 0 : i32
    %c0_i32_0 = arith.constant 0 : i32
    %c0_i32_1 = arith.constant 0 : i32
    return %c0_i32, %c0_i32_0 : i32, i32
  }
  func.func @transform_5(%arg0: i32, %arg1: i32) -> (i32, i32) {
    %c0_i32 = arith.constant 0 : i32
    %c0_i32_0 = arith.constant 0 : i32
    %c0_i32_1 = arith.constant 0 : i32
    return %c0_i32, %c0_i32_0 : i32, i32
  }
  func.func @transform_6(%arg0: i32, %arg1: i32) -> (i32, i32) {
    %c0_i32 = arith.constant 0 : i32
    %c0_i32_0 = arith.constant 0 : i32
    %c0_i32_1 = arith.constant 0 : i32
    return %c0_i32, %c0_i32_0 : i32, i32
  }
  func.func @transform_7(%arg0: i32, %arg1: i32) -> (i32, i32, i32) {
    %c0_i32 = arith.constant 0 : i32
    %c0_i32_0 = arith.constant 0 : i32
    %c0_i32_1 = arith.constant 0 : i32
    return %arg0, %c0_i32, %c0_i32_0 : i32, i32, i32
  }
}

</mosaic_0001>

<llo_original>
// kernel: dpfm_loss.1
$region0: #{dpfm_loss.1}
  #allocation0 [shape = 'u32[]', space=smem, size = 0x4, offset = 0x4, fixed_abs, tag = 'smem constant byte address 0x4 - core index']
  #allocation1 [shape = 'u32[144,128]{1,0:T(1,128)}', space=vmem, size = 0x12000, scoped, tag = 'internal scratch']
  #allocation2 [shape = 'bf16[128,128]{1,0:T(8,128)(2,1)}', space=vmem, size = 0x8000, scoped, tag = 'scratch operand']
  #allocation3 [shape = 'bf16[128,128]{1,0:T(8,128)(2,1)}', space=vmem, size = 0x8000, scoped, tag = 'scratch operand']
  #allocation4 [shape = 'bf16[16,128]{1,0:T(8,128)(2,1)}', space=vmem, size = 0x1000, scoped, tag = 'scratch operand']
  #allocation5 [shape = 'bf16[16,128]{1,0:T(8,128)(2,1)}', space=vmem, size = 0x1000, scoped, tag = 'scratch operand']
  #allocation6 [shape = 'f32[16,1]{1,0:T(8,128)}', space=vmem, size = 0x2000, scoped, tag = 'scratch operand']
  #allocation7 [shape = 'f32[16,1]{1,0:T(8,128)}', space=vmem, size = 0x2000, scoped, tag = 'scratch operand']
  #allocation8 [shape = 'f32[16,1]{1,0:T(8,128)}', space=vmem, size = 0x2000, scoped, tag = 'scratch operand']
  #allocation9 [shape = 'f32[16,1]{1,0:T(8,128)}', space=vmem, size = 0x2000, scoped, tag = 'scratch operand']
  #allocation10 [shape = 'f32[16,1]{1,0:T(8,128)}', space=vmem, size = 0x2000, scoped, tag = 'scratch operand']
  %s0 = inlined_call_operand.vmem [shape: s32[16,1], index: 0, kind: input, shape index: {}]
  %s1 = inlined_call_operand.vmem [shape: s32[16,1], index: 1, kind: input, shape index: {}]
  %s2 = inlined_call_operand.vmem [shape: f32[2,256], index: 2, kind: input, shape index: {}]
  %s3 = inlined_call_operand.vmem [shape: f32[2,256], index: 3, kind: input, shape index: {}]
  %s4 = inlined_call_operand.vmem [shape: f32[4,128], index: 4, kind: input, shape index: {}]
  %s5 = inlined_call_operand.vmem [shape: f32[128,128], index: 5, kind: input, shape index: {}]
  %s6 = inlined_call_operand.vmem [shape: f32[128,128], index: 6, kind: input, shape index: {}]
  %s7 = inlined_call_operand.vmem [shape: f32[1,8,128], index: 7, kind: output, shape index: {}]
  %s8 = sld [smem:[#allocation0]]
  $region46: #{dpfm_loss.1} parent=0
    _
  %s10 = ssub.s32 1, %s8
  %s11 = scalar_select 0, %s10, %s8
  // Predicated region
  $region2: #{dpfm_loss.1} parent=0 // pred_check
    _
  $region3: #{dpfm_loss.1} parent=0 // pred_check_branch
    %13 = sbr.rel (0) target = $region5
  $region4: #{dpfm_loss.1} parent=0 // pred_region
    _
  $region5: #{dpfm_loss.1} parent=0 // pred_fallthru
    _
  // Predicated region
  $region6: #{dpfm_loss.1} parent=0 // pred_check
    _
  $region7: #{dpfm_loss.1} parent=0 // pred_check_branch
    %15 = sbr.rel (0) target = $region9
  $region8: #{dpfm_loss.1} parent=0 // pred_region
    _
  $region9: #{dpfm_loss.1} parent=0 // pred_fallthru
    _
  // Predicated region
  $region10: #{dpfm_loss.1} parent=0 // pred_check
    _
  $region11: #{dpfm_loss.1} parent=0 // pred_check_branch
    %17 = sbr.rel (0) target = $region13
  $region12: #{dpfm_loss.1} parent=0 // pred_region
    _
  $region13: #{dpfm_loss.1} parent=0 // pred_fallthru
    _
  // Predicated region
  $region14: #{dpfm_loss.1} parent=0 // pred_check
    _
  $region15: #{dpfm_loss.1} parent=0 // pred_check_branch
    %19 = sbr.rel (0) target = $region17
  $region16: #{dpfm_loss.1} parent=0 // pred_region
    _
  $region17: #{dpfm_loss.1} parent=0 // pred_fallthru
    _
  // Predicated region
  $region18: #{dpfm_loss.1} parent=0 // pred_check
    _
  $region19: #{dpfm_loss.1} parent=0 // pred_check_branch
    %21 = sbr.rel (0) target = $region21
  $region20: #{dpfm_loss.1} parent=0 // pred_region
    _
  $region21: #{dpfm_loss.1} parent=0 // pred_fallthru
    _
  // Predicated region
  $region22: #{dpfm_loss.1} parent=0 // pred_check
    _
  $region23: #{dpfm_loss.1} parent=0 // pred_check_branch
    %23 = sbr.rel (0) target = $region25
  $region24: #{dpfm_loss.1} parent=0 // pred_region
    _
  $region25: #{dpfm_loss.1} parent=0 // pred_fallthru
    _
  // Predicated region
  $region26: #{dpfm_loss.1} parent=0 // pred_check
    _
  $region27: #{dpfm_loss.1} parent=0 // pred_check_branch
    %25 = sbr.rel (0) target = $region29
  $region28: #{dpfm_loss.1} parent=0 // pred_region
    _
  $region29: #{dpfm_loss.1} parent=0 // pred_fallthru
    _
  %p27 = scmp.eq.s32.totalorder 0, 0
  // Predicated region
  $region30: #{dpfm_loss.1} parent=0 // pred_check
    %p28 = pneg %p27
  $region31: #{dpfm_loss.1} parent=0 // pred_check_branch
    %30 = sbr.rel (%p28) target = $region33
  $region32: #{dpfm_loss.1} parent=0 // pred_region
    %v31 = vld [vmem:[%s5] sm:$0xff]
    %v32 = vld [vmem:[%s5 + $0x8] sm:$0xff]
    %v33 = vld [vmem:[%s5 + $0x10] sm:$0xff]
    %v34 = vld [vmem:[%s5 + $0x18] sm:$0xff]
    %v35 = vld [vmem:[%s5 + $0x20] sm:$0xff]
    %v36 = vld [vmem:[%s5 + $0x28] sm:$0xff]
    %v37 = vld [vmem:[%s5 + $0x30] sm:$0xff]
    %v38 = vld [vmem:[%s5 + $0x38] sm:$0xff]
    %v39 = vld [vmem:[%s5 + $0x40] sm:$0xff]
    %v40 = vld [vmem:[%s5 + $0x48] sm:$0xff]
    %v41 = vld [vmem:[%s5 + $0x50] sm:$0xff]
    %v42 = vld [vmem:[%s5 + $0x58] sm:$0xff]
    %v43 = vld [vmem:[%s5 + $0x60] sm:$0xff]
    %v44 = vld [vmem:[%s5 + $0x68] sm:$0xff]
    %v45 = vld [vmem:[%s5 + $0x70] sm:$0xff]
    %v46 = vld [vmem:[%s5 + $0x78] sm:$0xff]
    %v47 = vmul.f32 %v31, %v31
    %v48 = vmul.f32 %v32, %v32
    %v49 = vmul.f32 %v33, %v33
    %v50 = vmul.f32 %v34, %v34
    %v51 = vmul.f32 %v35, %v35
    %v52 = vmul.f32 %v36, %v36
    %v53 = vmul.f32 %v37, %v37
    %v54 = vmul.f32 %v38, %v38
    %v55 = vmul.f32 %v39, %v39
    %v56 = vmul.f32 %v40, %v40
    %v57 = vmul.f32 %v41, %v41
    %v58 = vmul.f32 %v42, %v42
    %v59 = vmul.f32 %v43, %v43
    %v60 = vmul.f32 %v44, %v44
    %v61 = vmul.f32 %v45, %v45
    %v62 = vmul.f32 %v46, %v46
    %63 = vadd.xlane.f32.xlu0 %v47
    %v64 = vpop.xlane.xlu0 %63
    %65 = vadd.xlane.f32.xlu0 %v48
    %v66 = vpop.xlane.xlu0 %65
    %67 = vadd.xlane.f32.xlu0 %v49
    %v68 = vpop.xlane.xlu0 %67
    %69 = vadd.xlane.f32.xlu0 %v50
    %v70 = vpop.xlane.xlu0 %69
    %71 = vadd.xlane.f32.xlu0 %v51
    %v72 = vpop.xlane.xlu0 %71
    %73 = vadd.xlane.f32.xlu0 %v52
    %v74 = vpop.xlane.xlu0 %73
    %75 = vadd.xlane.f32.xlu0 %v53
    %v76 = vpop.xlane.xlu0 %75
    %77 = vadd.xlane.f32.xlu0 %v54
    %v78 = vpop.xlane.xlu0 %77
    %79 = vadd.xlane.f32.xlu0 %v55
    %v80 = vpop.xlane.xlu0 %79
    %81 = vadd.xlane.f32.xlu0 %v56
    %v82 = vpop.xlane.xlu0 %81
    %83 = vadd.xlane.f32.xlu0 %v57
    %v84 = vpop.xlane.xlu0 %83
    %85 = vadd.xlane.f32.xlu0 %v58
    %v86 = vpop.xlane.xlu0 %85
    %87 = vadd.xlane.f32.xlu0 %v59
    %v88 = vpop.xlane.xlu0 %87
    %89 = vadd.xlane.f32.xlu0 %v60
    %v90 = vpop.xlane.xlu0 %89
    %91 = vadd.xlane.f32.xlu0 %v61
    %v92 = vpop.xlane.xlu0 %91
    %93 = vadd.xlane.f32.xlu0 %v62
    %v94 = vpop.xlane.xlu0 %93
    %v95 = vmax.f32 %v64, 1e-24
    %v96 = vmax.f32 %v66, 1e-24
    %v97 = vmax.f32 %v68, 1e-24
    %v98 = vmax.f32 %v70, 1e-24
    %v99 = vmax.f32 %v72, 1e-24
    %v100 = vmax.f32 %v74, 1e-24
    %v101 = vmax.f32 %v76, 1e-24
    %v102 = vmax.f32 %v78, 1e-24
    %v103 = vmax.f32 %v80, 1e-24
    %v104 = vmax.f32 %v82, 1e-24
    %v105 = vmax.f32 %v84, 1e-24
    %v106 = vmax.f32 %v86, 1e-24
    %v107 = vmax.f32 %v88, 1e-24
    %v108 = vmax.f32 %v90, 1e-24
    %v109 = vmax.f32 %v92, 1e-24
    %v110 = vmax.f32 %v94, 1e-24
    %v111 = vrsqrt.pop %v95
    %v112 = vrsqrt.pop %v96
    %v113 = vrsqrt.pop %v97
    %v114 = vrsqrt.pop %v98
    %v115 = vrsqrt.pop %v99
    %v116 = vrsqrt.pop %v100
    %v117 = vrsqrt.pop %v101
    %v118 = vrsqrt.pop %v102
    %v119 = vrsqrt.pop %v103
    %v120 = vrsqrt.pop %v104
    %v121 = vrsqrt.pop %v105
    %v122 = vrsqrt.pop %v106
    %v123 = vrsqrt.pop %v107
    %v124 = vrsqrt.pop %v108
    %v125 = vrsqrt.pop %v109
    %v126 = vrsqrt.pop %v110
    %v127 = vmul.f32 %v31, %v111
    %v128 = vmul.f32 %v32, %v112
    %v129 = vmul.f32 %v33, %v113
    %v130 = vmul.f32 %v34, %v114
    %v131 = vmul.f32 %v35, %v115
    %v132 = vmul.f32 %v36, %v116
    %v133 = vmul.f32 %v37, %v117
    %v134 = vmul.f32 %v38, %v118
    %v135 = vmul.f32 %v39, %v119
    %v136 = vmul.f32 %v40, %v120
    %v137 = vmul.f32 %v41, %v121
    %v138 = vmul.f32 %v42, %v122
    %v139 = vmul.f32 %v43, %v123
    %v140 = vmul.f32 %v44, %v124
    %v141 = vmul.f32 %v45, %v125
    %v142 = vmul.f32 %v46, %v126
    %v143 = vpack.c.bf16 %v128, %v127
    %v144 = vpack.c.bf16 %v130, %v129
    %v145 = vpack.c.bf16 %v132, %v131
    %v146 = vpack.c.bf16 %v134, %v133
    %v147 = vpack.c.bf16 %v136, %v135
    %v148 = vpack.c.bf16 %v138, %v137
    %v149 = vpack.c.bf16 %v140, %v139
    %v150 = vpack.c.bf16 %v142, %v141
    %v151 = vld [vmem:[%s6] sm:$0xff]
    %v152 = vld [vmem:[%s6 + $0x8] sm:$0xff]
    %v153 = vld [vmem:[%s6 + $0x10] sm:$0xff]
    %v154 = vld [vmem:[%s6 + $0x18] sm:$0xff]
    %v155 = vld [vmem:[%s6 + $0x20] sm:$0xff]
    %v156 = vld [vmem:[%s6 + $0x28] sm:$0xff]
    %v157 = vld [vmem:[%s6 + $0x30] sm:$0xff]
    %v158 = vld [vmem:[%s6 + $0x38] sm:$0xff]
    %v159 = vld [vmem:[%s6 + $0x40] sm:$0xff]
    %v160 = vld [vmem:[%s6 + $0x48] sm:$0xff]
    %v161 = vld [vmem:[%s6 + $0x50] sm:$0xff]
    %v162 = vld [vmem:[%s6 + $0x58] sm:$0xff]
    %v163 = vld [vmem:[%s6 + $0x60] sm:$0xff]
    %v164 = vld [vmem:[%s6 + $0x68] sm:$0xff]
    %v165 = vld [vmem:[%s6 + $0x70] sm:$0xff]
    %v166 = vld [vmem:[%s6 + $0x78] sm:$0xff]
    %v167 = vmul.f32 %v151, %v151
    %v168 = vmul.f32 %v152, %v152
    %v169 = vmul.f32 %v153, %v153
    %v170 = vmul.f32 %v154, %v154
    %v171 = vmul.f32 %v155, %v155
    %v172 = vmul.f32 %v156, %v156
    %v173 = vmul.f32 %v157, %v157
    %v174 = vmul.f32 %v158, %v158
    %v175 = vmul.f32 %v159, %v159
    %v176 = vmul.f32 %v160, %v160
    %v177 = vmul.f32 %v161, %v161
    %v178 = vmul.f32 %v162, %v162
    %v179 = vmul.f32 %v163, %v163
    %v180 = vmul.f32 %v164, %v164
    %v181 = vmul.f32 %v165, %v165
    %v182 = vmul.f32 %v166, %v166
    %183 = vadd.xlane.f32.xlu0 %v167
    %v184 = vpop.xlane.xlu0 %183
    %185 = vadd.xlane.f32.xlu0 %v168
    %v186 = vpop.xlane.xlu0 %185
    %187 = vadd.xlane.f32.xlu0 %v169
    %v188 = vpop.xlane.xlu0 %187
    %189 = vadd.xlane.f32.xlu0 %v170
    %v190 = vpop.xlane.xlu0 %189
    %191 = vadd.xlane.f32.xlu0 %v171
    %v192 = vpop.xlane.xlu0 %191
    %193 = vadd.xlane.f32.xlu0 %v172
    %v194 = vpop.xlane.xlu0 %193
    %195 = vadd.xlane.f32.xlu0 %v173
    %v196 = vpop.xlane.xlu0 %195
    %197 = vadd.xlane.f32.xlu0 %v174
    %v198 = vpop.xlane.xlu0 %197
    %199 = vadd.xlane.f32.xlu0 %v175
    %v200 = vpop.xlane.xlu0 %199
    %201 = vadd.xlane.f32.xlu0 %v176
    %v202 = vpop.xlane.xlu0 %201
    %203 = vadd.xlane.f32.xlu0 %v177
    %v204 = vpop.xlane.xlu0 %203
    %205 = vadd.xlane.f32.xlu0 %v178
    %v206 = vpop.xlane.xlu0 %205
    %207 = vadd.xlane.f32.xlu0 %v179
    %v208 = vpop.xlane.xlu0 %207
    %209 = vadd.xlane.f32.xlu0 %v180
    %v210 = vpop.xlane.xlu0 %209
    %211 = vadd.xlane.f32.xlu0 %v181
    %v212 = vpop.xlane.xlu0 %211
    %213 = vadd.xlane.f32.xlu0 %v182
    %v214 = vpop.xlane.xlu0 %213
    %v215 = vmax.f32 %v184, 1e-24
    %v216 = vmax.f32 %v186, 1e-24
    %v217 = vmax.f32 %v188, 1e-24
    %v218 = vmax.f32 %v190, 1e-24
    %v219 = vmax.f32 %v192, 1e-24
    %v220 = vmax.f32 %v194, 1e-24
    %v221 = vmax.f32 %v196, 1e-24
    %v222 = vmax.f32 %v198, 1e-24
    %v223 = vmax.f32 %v200, 1e-24
    %v224 = vmax.f32 %v202, 1e-24
    %v225 = vmax.f32 %v204, 1e-24
    %v226 = vmax.f32 %v206, 1e-24
    %v227 = vmax.f32 %v208, 1e-24
    %v228 = vmax.f32 %v210, 1e-24
    %v229 = vmax.f32 %v212, 1e-24
    %v230 = vmax.f32 %v214, 1e-24
    %v231 = vrsqrt.pop %v215
    %v232 = vrsqrt.pop %v216
    %v233 = vrsqrt.pop %v217
    %v234 = vrsqrt.pop %v218
    %v235 = vrsqrt.pop %v219
    %v236 = vrsqrt.pop %v220
    %v237 = vrsqrt.pop %v221
    %v238 = vrsqrt.pop %v222
    %v239 = vrsqrt.pop %v223
    %v240 = vrsqrt.pop %v224
    %v241 = vrsqrt.pop %v225
    %v242 = vrsqrt.pop %v226
    %v243 = vrsqrt.pop %v227
    %v244 = vrsqrt.pop %v228
    %v245 = vrsqrt.pop %v229
    %v246 = vrsqrt.pop %v230
    %v247 = vmul.f32 %v151, %v231
    %v248 = vmul.f32 %v152, %v232
    %v249 = vmul.f32 %v153, %v233
    %v250 = vmul.f32 %v154, %v234
    %v251 = vmul.f32 %v155, %v235
    %v252 = vmul.f32 %v156, %v236
    %v253 = vmul.f32 %v157, %v237
    %v254 = vmul.f32 %v158, %v238
    %v255 = vmul.f32 %v159, %v239
    %v256 = vmul.f32 %v160, %v240
    %v257 = vmul.f32 %v161, %v241
    %v258 = vmul.f32 %v162, %v242
    %v259 = vmul.f32 %v163, %v243
    %v260 = vmul.f32 %v164, %v244
    %v261 = vmul.f32 %v165, %v245
    %v262 = vmul.f32 %v166, %v246
    %v263 = vpack.c.bf16 %v248, %v247
    %v264 = vpack.c.bf16 %v250, %v249
    %v265 = vpack.c.bf16 %v252, %v251
    %v266 = vpack.c.bf16 %v254, %v253
    %v267 = vpack.c.bf16 %v256, %v255
    %v268 = vpack.c.bf16 %v258, %v257
    %v269 = vpack.c.bf16 %v260, %v259
    %v270 = vpack.c.bf16 %v262, %v261
    %v279 = vunpack.c.l.b16 %v143
    %v280 = vunpack.c.h.b16 %v143
    %v281 = vunpack.c.l.b16 %v144
    %v282 = vunpack.c.h.b16 %v144
    %v283 = vunpack.c.l.b16 %v145
    %v284 = vunpack.c.h.b16 %v145
    %v285 = vunpack.c.l.b16 %v146
    %v286 = vunpack.c.h.b16 %v146
    %v287 = vunpack.c.l.b16 %v147
    %v288 = vunpack.c.h.b16 %v147
    %v289 = vunpack.c.l.b16 %v148
    %v290 = vunpack.c.h.b16 %v148
    %v291 = vunpack.c.l.b16 %v149
    %v292 = vunpack.c.h.b16 %v149
    %v293 = vunpack.c.l.b16 %v150
    %v294 = vunpack.c.h.b16 %v150
    %v295 = vpack.c.b16 %v279, %v279
    %v296 = vpack.c.b16 %v280, %v280
    %v297 = vpack.c.b16 %v281, %v281
    %v298 = vpack.c.b16 %v282, %v282
    %v299 = vpack.c.b16 %v283, %v283
    %v300 = vpack.c.b16 %v284, %v284
    %v301 = vpack.c.b16 %v285, %v285
    %v302 = vpack.c.b16 %v286, %v286
    %v303 = vpack.c.b16 %v287, %v287
    %v304 = vpack.c.b16 %v288, %v288
    %v305 = vpack.c.b16 %v289, %v289
    %v306 = vpack.c.b16 %v290, %v290
    %v307 = vpack.c.b16 %v291, %v291
    %v308 = vpack.c.b16 %v292, %v292
    %v309 = vpack.c.b16 %v293, %v293
    %v310 = vpack.c.b16 %v294, %v294
    %327 = vst [vmem:[#allocation2] sm:$0xf] %v295
    %328 = vst [vmem:[#allocation2 + $0x4] sm:$0xf] %v296
    %329 = vst [vmem:[#allocation2 + $0x8] sm:$0xf] %v297
    %330 = vst [vmem:[#allocation2 + $0xc] sm:$0xf] %v298
    %331 = vst [vmem:[#allocation2 + $0x10] sm:$0xf] %v299
    %332 = vst [vmem:[#allocation2 + $0x14] sm:$0xf] %v300
    %333 = vst [vmem:[#allocation2 + $0x18] sm:$0xf] %v301
    %334 = vst [vmem:[#allocation2 + $0x1c] sm:$0xf] %v302
    %335 = vst [vmem:[#allocation2 + $0x20] sm:$0xf] %v303
    %336 = vst [vmem:[#allocation2 + $0x24] sm:$0xf] %v304
    %337 = vst [vmem:[#allocation2 + $0x28] sm:$0xf] %v305
    %338 = vst [vmem:[#allocation2 + $0x2c] sm:$0xf] %v306
    %339 = vst [vmem:[#allocation2 + $0x30] sm:$0xf] %v307
    %340 = vst [vmem:[#allocation2 + $0x34] sm:$0xf] %v308
    %341 = vst [vmem:[#allocation2 + $0x38] sm:$0xf] %v309
    %342 = vst [vmem:[#allocation2 + $0x3c] sm:$0xf] %v310
    %v351 = vunpack.c.l.b16 %v263
    %v352 = vunpack.c.h.b16 %v263
    %v353 = vunpack.c.l.b16 %v264
    %v354 = vunpack.c.h.b16 %v264
    %v355 = vunpack.c.l.b16 %v265
    %v356 = vunpack.c.h.b16 %v265
    %v357 = vunpack.c.l.b16 %v266
    %v358 = vunpack.c.h.b16 %v266
    %v359 = vunpack.c.l.b16 %v267
    %v360 = vunpack.c.h.b16 %v267
    %v361 = vunpack.c.l.b16 %v268
    %v362 = vunpack.c.h.b16 %v268
    %v363 = vunpack.c.l.b16 %v269
    %v364 = vunpack.c.h.b16 %v269
    %v365 = vunpack.c.l.b16 %v270
    %v366 = vunpack.c.h.b16 %v270
    %v367 = vpack.c.b16 %v351, %v351
    %v368 = vpack.c.b16 %v352, %v352
    %v369 = vpack.c.b16 %v353, %v353
    %v370 = vpack.c.b16 %v354, %v354
    %v371 = vpack.c.b16 %v355, %v355
    %v372 = vpack.c.b16 %v356, %v356
    %v373 = vpack.c.b16 %v357, %v357
    %v374 = vpack.c.b16 %v358, %v358
    %v375 = vpack.c.b16 %v359, %v359
    %v376 = vpack.c.b16 %v360, %v360
    %v377 = vpack.c.b16 %v361, %v361
    %v378 = vpack.c.b16 %v362, %v362
    %v379 = vpack.c.b16 %v363, %v363
    %v380 = vpack.c.b16 %v364, %v364
    %v381 = vpack.c.b16 %v365, %v365
    %v382 = vpack.c.b16 %v366, %v366
    %399 = vst [vmem:[#allocation3] sm:$0xf] %v367
    %400 = vst [vmem:[#allocation3 + $0x4] sm:$0xf] %v368
    %401 = vst [vmem:[#allocation3 + $0x8] sm:$0xf] %v369
    %402 = vst [vmem:[#allocation3 + $0xc] sm:$0xf] %v370
    %403 = vst [vmem:[#allocation3 + $0x10] sm:$0xf] %v371
    %404 = vst [vmem:[#allocation3 + $0x14] sm:$0xf] %v372
    %405 = vst [vmem:[#allocation3 + $0x18] sm:$0xf] %v373
    %406 = vst [vmem:[#allocation3 + $0x1c] sm:$0xf] %v374
    %407 = vst [vmem:[#allocation3 + $0x20] sm:$0xf] %v375
    %408 = vst [vmem:[#allocation3 + $0x24] sm:$0xf] %v376
    %409 = vst [vmem:[#allocation3 + $0x28] sm:$0xf] %v377
    %410 = vst [vmem:[#allocation3 + $0x2c] sm:$0xf] %v378
    %411 = vst [vmem:[#allocation3 + $0x30] sm:$0xf] %v379
    %412 = vst [vmem:[#allocation3 + $0x34] sm:$0xf] %v380
    %413 = vst [vmem:[#allocation3 + $0x38] sm:$0xf] %v381
    %414 = vst [vmem:[#allocation3 + $0x3c] sm:$0xf] %v382
    %v415 = vlaneseq
    %v416 = vand.u32 %v415, 127
    %v417 = vld [vmem:[%s0] sm:$0xff]
    %v418 = vld [vmem:[%s0 + $0x8] sm:$0xff]
    %419 = vset.pattern.permute.xlu0 0
    %420 = vperm.xlu0 %419, %v417
    %v421 = vpop.permute.xlu0 %420
    %422 = vset.pattern.permute.xlu0 0
    %423 = vperm.xlu0 %422, %v418
    %v424 = vpop.permute.xlu0 %423
    %vm425 = vcmp.eq.s32.totalorder %v416, %v421
    %vm426 = vcmp.eq.s32.totalorder %v416, %v424
    %v427 = vsel %vm425, 1, 0
    %v428 = vsel %vm426, 1, 0
    %v429 = vcvt.s32.f32 %v427
    %v430 = vcvt.s32.f32 %v428
    %v431 = vpack.c.bf16 %v430, %v429
    %v432 = vld [vmem:[%s1] sm:$0xff]
    %v433 = vld [vmem:[%s1 + $0x8] sm:$0xff]
    %434 = vset.pattern.permute.xlu0 0
    %435 = vperm.xlu0 %434, %v432
    %v436 = vpop.permute.xlu0 %435
    %437 = vset.pattern.permute.xlu0 0
    %438 = vperm.xlu0 %437, %v433
    %v439 = vpop.permute.xlu0 %438
    %vm440 = vcmp.eq.s32.totalorder %v416, %v436
    %vm441 = vcmp.eq.s32.totalorder %v416, %v439
    %v442 = vsel %vm440, 1, 0
    %v443 = vsel %vm441, 1, 0
    %v444 = vcvt.s32.f32 %v442
    %v445 = vcvt.s32.f32 %v443
    %v446 = vpack.c.bf16 %v445, %v444
    %447 = vmatprep.subr.bf16.mxu0 0
    %448 = vmatpush1.bf16.msra.mxu0 %v150
    %449 = vmatprep.subr.bf16.mxu0 0
    %450 = vmatpush1.bf16.msra.mxu0 %v149
    %451 = vmatprep.subr.bf16.mxu0 0
    %452 = vmatpush1.bf16.msra.mxu0 %v148
    %453 = vmatprep.subr.bf16.mxu0 0
    %454 = vmatpush1.bf16.msra.mxu0 %v147
    %455 = vmatprep.subr.bf16.mxu0 0
    %456 = vmatpush1.bf16.msra.mxu0 %v146
    %457 = vmatprep.subr.bf16.mxu0 0
    %458 = vmatpush1.bf16.msra.mxu0 %v145
    %459 = vmatprep.subr.bf16.mxu0 0
    %460 = vmatpush1.bf16.msra.mxu0 %v144
    %461 = vmatprep.subr.bf16.mxu0 0
    %462 = vmatpush1.bf16.msra.mxu0 %v143
    %463 = vmatprep.subr.bf16.mxu0 0
    %464 = vmatpush2.bf16.msra.mxu0 0
    %465 = vmatprep.subr.bf16.mxu0 0
    %466 = vmatpush2.bf16.msra.mxu0 0
    %467 = vmatprep.subr.bf16.mxu0 0
    %468 = vmatpush2.bf16.msra.mxu0 0
    %469 = vmatprep.subr.bf16.mxu0 0
    %470 = vmatpush2.bf16.msra.mxu0 0
    %471 = vmatprep.subr.bf16.mxu0 0
    %472 = vmatpush2.bf16.msra.mxu0 0
    %473 = vmatprep.subr.bf16.mxu0 0
    %474 = vmatpush2.bf16.msra.mxu0 0
    %475 = vmatprep.subr.bf16.mxu0 0
    %476 = vmatpush2.bf16.msra.mxu0 0
    %477 = vmatprep.subr.bf16.mxu0 0
    %478 = vmatpush2.bf16.msra.mxu0 0
    %479 = vmatprep.mubr.bf16.mxu0 0
    %480 = vmatmul.mubr.bf16.gmra.mxu0 %v431
    %v481 = vpop.f32.mrf.mxu0
    %v482 = vadd.f32 0.0, %v481
    %v483 = vpop.f32.mrf.mxu0
    %v484 = vpop.f32.mrf.mxu0
    %v485 = vadd.f32 0.0, %v484
    %v486 = vpop.f32.mrf.mxu0
    %487 = vdwg.mxu0
    %488 = vmatprep.subr.bf16.mxu0 0
    %489 = vmatpush1.bf16.msra.mxu0 %v270
    %490 = vmatprep.subr.bf16.mxu0 0
    %491 = vmatpush1.bf16.msra.mxu0 %v269
    %492 = vmatprep.subr.bf16.mxu0 0
    %493 = vmatpush1.bf16.msra.mxu0 %v268
    %494 = vmatprep.subr.bf16.mxu0 0
    %495 = vmatpush1.bf16.msra.mxu0 %v267
    %496 = vmatprep.subr.bf16.mxu0 0
    %497 = vmatpush1.bf16.msra.mxu0 %v266
    %498 = vmatprep.subr.bf16.mxu0 0
    %499 = vmatpush1.bf16.msra.mxu0 %v265
    %500 = vmatprep.subr.bf16.mxu0 0
    %501 = vmatpush1.bf16.msra.mxu0 %v264
    %502 = vmatprep.subr.bf16.mxu0 0
    %503 = vmatpush1.bf16.msra.mxu0 %v263
    %504 = vmatprep.subr.bf16.mxu0 0
    %505 = vmatpush2.bf16.msra.mxu0 0
    %506 = vmatprep.subr.bf16.mxu0 0
    %507 = vmatpush2.bf16.msra.mxu0 0
    %508 = vmatprep.subr.bf16.mxu0 0
    %509 = vmatpush2.bf16.msra.mxu0 0
    %510 = vmatprep.subr.bf16.mxu0 0
    %511 = vmatpush2.bf16.msra.mxu0 0
    %512 = vmatprep.subr.bf16.mxu0 0
    %513 = vmatpush2.bf16.msra.mxu0 0
    %514 = vmatprep.subr.bf16.mxu0 0
    %515 = vmatpush2.bf16.msra.mxu0 0
    %516 = vmatprep.subr.bf16.mxu0 0
    %517 = vmatpush2.bf16.msra.mxu0 0
    %518 = vmatprep.subr.bf16.mxu0 0
    %519 = vmatpush2.bf16.msra.mxu0 0
    %520 = vmatprep.mubr.bf16.mxu0 0
    %521 = vmatmul.mubr.bf16.gmra.mxu0 %v446
    %v522 = vpop.f32.mrf.mxu0
    %v523 = vadd.f32 0.0, %v522
    %v524 = vpop.f32.mrf.mxu0
    %v525 = vpop.f32.mrf.mxu0
    %v526 = vadd.f32 0.0, %v525
    %v527 = vpop.f32.mrf.mxu0
    %528 = vdwg.mxu0
    %v529 = vpack.c.bf16 %v485, %v482
    %v531 = vunpack.c.l.b16 %v529
    %v532 = vunpack.c.h.b16 %v529
    %v533 = vpack.c.b16 %v531, %v531
    %v534 = vpack.c.b16 %v532, %v532
    %537 = vst [vmem:[#allocation4] sm:$0xf] %v533
    %538 = vst [vmem:[#allocation4 + $0x4] sm:$0xf] %v534
    %v539 = vpack.c.bf16 %v526, %v523
    %v541 = vunpack.c.l.b16 %v539
    %v542 = vunpack.c.h.b16 %v539
    %v543 = vpack.c.b16 %v541, %v541
    %v544 = vpack.c.b16 %v542, %v542
    %547 = vst [vmem:[#allocation5] sm:$0xf] %v543
    %548 = vst [vmem:[#allocation5 + $0x4] sm:$0xf] %v544
    %v549 = vmul.f32 %v482, %v523
    %v550 = vmul.f32 %v485, %v526
    %551 = vadd.xlane.f32.xlu0 %v549
    %v552 = vpop.xlane.xlu0 %551
    %553 = vadd.xlane.f32.xlu0 %v550
    %v554 = vpop.xlane.xlu0 %553
    %v555 = vmul.f32 %v552, 14.285714
    %v556 = vmul.f32 %v554, 14.285714
    %vm557 = vcmask 7168
    %558 = vst.msk [vmem:[#allocation6] sm:$0xff] %vm557, %v555
    %559 = vst.msk [vmem:[#allocation6 + $0x8] sm:$0xff] %vm557, %v556
    %560 = vst.msk [vmem:[#allocation7] sm:$0xff] %vm557, -1e+30
    %561 = vst.msk [vmem:[#allocation7 + $0x8] sm:$0xff] %vm557, -1e+30
    %562 = vst.msk [vmem:[#allocation8] sm:$0xff] %vm557, 0.0
    %563 = vst.msk [vmem:[#allocation8 + $0x8] sm:$0xff] %vm557, 0.0
    %564 = vst.msk [vmem:[#allocation9] sm:$0xff] %vm557, -1e+30
    %565 = vst.msk [vmem:[#allocation9 + $0x8] sm:$0xff] %vm557, -1e+30
    %566 = vst.msk [vmem:[#allocation10] sm:$0xff] %vm557, 0.0
    %567 = vst.msk [vmem:[#allocation10 + $0x8] sm:$0xff] %vm557, 0.0
  $region33: #{dpfm_loss.1} parent=0 // pred_fallthru
    _
  %s568 = smul.u32 0, 128
  %s569 = sshra.s32 %s568, 3
  %s570 = sand.u32 %s568, 7
  %s571 = smul.addr %s569, 4
  %s572 = scalar_lea.vmem [#allocation3], %s571
  %v573 = vld [vmem:[%s572] sm:$0xf]
  %v574 = vld [vmem:[%s572 + $0x4] sm:$0xf]
  %v575 = vld [vmem:[%s572 + $0x8] sm:$0xf]
  %v576 = vld [vmem:[%s572 + $0xc] sm:$0xf]
  %v577 = vld [vmem:[%s572 + $0x10] sm:$0xf]
  %v578 = vld [vmem:[%s572 + $0x14] sm:$0xf]
  %v579 = vld [vmem:[%s572 + $0x18] sm:$0xf]
  %v580 = vld [vmem:[%s572 + $0x1c] sm:$0xf]
  %v581 = vld [vmem:[%s572 + $0x20] sm:$0xf]
  %v582 = vld [vmem:[%s572 + $0x24] sm:$0xf]
  %v583 = vld [vmem:[%s572 + $0x28] sm:$0xf]
  %v584 = vld [vmem:[%s572 + $0x2c] sm:$0xf]
  %v585 = vld [vmem:[%s572 + $0x30] sm:$0xf]
  %v586 = vld [vmem:[%s572 + $0x34] sm:$0xf]
  %v587 = vld [vmem:[%s572 + $0x38] sm:$0xf]
  %v588 = vld [vmem:[%s572 + $0x3c] sm:$0xf]
  %s589 = smul.addr %s569, 4
  %s590 = scalar_lea.vmem [#allocation2], %s589
  %v591 = vld [vmem:[%s590] sm:$0xf]
  %v592 = vld [vmem:[%s590 + $0x4] sm:$0xf]
  %v593 = vld [vmem:[%s590 + $0x8] sm:$0xf]
  %v594 = vld [vmem:[%s590 + $0xc] sm:$0xf]
  %v595 = vld [vmem:[%s590 + $0x10] sm:$0xf]
  %v596 = vld [vmem:[%s590 + $0x14] sm:$0xf]
  %v597 = vld [vmem:[%s590 + $0x18] sm:$0xf]
  %v598 = vld [vmem:[%s590 + $0x1c] sm:$0xf]
  %v599 = vld [vmem:[%s590 + $0x20] sm:$0xf]
  %v600 = vld [vmem:[%s590 + $0x24] sm:$0xf]
  %v601 = vld [vmem:[%s590 + $0x28] sm:$0xf]
  %v602 = vld [vmem:[%s590 + $0x2c] sm:$0xf]
  %v603 = vld [vmem:[%s590 + $0x30] sm:$0xf]
  %v604 = vld [vmem:[%s590 + $0x34] sm:$0xf]
  %v605 = vld [vmem:[%s590 + $0x38] sm:$0xf]
  %v606 = vld [vmem:[%s590 + $0x3c] sm:$0xf]
  %v607 = vld [vmem:[#allocation4] sm:$0xf]
  %v608 = vld [vmem:[#allocation4 + $0x4] sm:$0xf]
  %v611 = vunpack.c.l.b16 %v607
  %v612 = vunpack.c.l.b16 %v608
  %v613 = vpack.c.b16 %v612, %v611
  %v631 = vunpack.c.l.b16 %v573
  %v632 = vunpack.c.l.b16 %v574
  %v633 = vunpack.c.l.b16 %v575
  %v634 = vunpack.c.l.b16 %v576
  %v635 = vunpack.c.l.b16 %v577
  %v636 = vunpack.c.l.b16 %v578
  %v637 = vunpack.c.l.b16 %v579
  %v638 = vunpack.c.l.b16 %v580
  %v639 = vunpack.c.l.b16 %v581
  %v640 = vunpack.c.l.b16 %v582
  %v641 = vunpack.c.l.b16 %v583
  %v642 = vunpack.c.l.b16 %v584
  %v643 = vunpack.c.l.b16 %v585
  %v644 = vunpack.c.l.b16 %v586
  %v645 = vunpack.c.l.b16 %v587
  %v646 = vunpack.c.l.b16 %v588
  %v647 = vpack.c.b16 %v632, %v631
  %v648 = vpack.c.b16 %v634, %v633
  %v649 = vpack.c.b16 %v636, %v635
  %v650 = vpack.c.b16 %v638, %v637
  %v651 = vpack.c.b16 %v640, %v639
  %v652 = vpack.c.b16 %v642, %v641
  %v653 = vpack.c.b16 %v644, %v643
  %v654 = vpack.c.b16 %v646, %v645
  %663 = vmatprep.subr.bf16.mxu0 0
  %664 = vmatpush1.bf16.xpose.msra.mxu0 %v654
  %665 = vmatprep.subr.bf16.mxu0 0
  %666 = vmatpush1.bf16.xpose.msra.mxu0 %v653
  %667 = vmatprep.subr.bf16.mxu0 0
  %668 = vmatpush1.bf16.xpose.msra.mxu0 %v652
  %669 = vmatprep.subr.bf16.mxu0 0
  %670 = vmatpush1.bf16.xpose.msra.mxu0 %v651
  %671 = vmatprep.subr.bf16.mxu0 0
  %672 = vmatpush1.bf16.xpose.msra.mxu0 %v650
  %673 = vmatprep.subr.bf16.mxu0 0
  %674 = vmatpush1.bf16.xpose.msra.mxu0 %v649
  %675 = vmatprep.subr.bf16.mxu0 0
  %676 = vmatpush1.bf16.xpose.msra.mxu0 %v648
  %677 = vmatprep.subr.bf16.mxu0 0
  %678 = vmatpush1.bf16.xpose.msra.mxu0 %v647
  %679 = vmatprep.subr.bf16.mxu0 0
  %680 = vmatpush2.bf16.xpose.msra.mxu0 0
  %681 = vmatprep.subr.bf16.mxu0 0
  %682 = vmatpush2.bf16.xpose.msra.mxu0 0
  %683 = vmatprep.subr.bf16.mxu0 0
  %684 = vmatpush2.bf16.xpose.msra.mxu0 0
  %685 = vmatprep.subr.bf16.mxu0 0
  %686 = vmatpush2.bf16.xpose.msra.mxu0 0
  %687 = vmatprep.subr.bf16.mxu0 0
  %688 = vmatpush2.bf16.xpose.msra.mxu0 0
  %689 = vmatprep.subr.bf16.mxu0 0
  %690 = vmatpush2.bf16.xpose.msra.mxu0 0
  %691 = vmatprep.subr.bf16.mxu0 0
  %692 = vmatpush2.bf16.xpose.msra.mxu0 0
  %693 = vmatprep.subr.bf16.mxu0 0
  %694 = vmatpush2.bf16.xpose.msra.mxu0 0
  %695 = vmatprep.mubr.bf16.mxu0 0
  %696 = vmatmul.mubr.bf16.gmra.mxu0 %v613
  %v697 = vpop.f32.mrf.mxu0
  %v698 = vadd.f32 0.0, %v697
  %v699 = vpop.f32.mrf.mxu0
  %v700 = vpop.f32.mrf.mxu0
  %v701 = vadd.f32 0.0, %v700
  %v702 = vpop.f32.mrf.mxu0
  %703 = vdwg.mxu0
  %v704 = vmul.f32 %v698, 14.285714
  %v705 = vmul.f32 %v701, 14.285714
  %v706 = vld [vmem:[#allocation5] sm:$0xf]
  %v707 = vld [vmem:[#allocation5 + $0x4] sm:$0xf]
  %v710 = vunpack.c.l.b16 %v706
  %v711 = vunpack.c.l.b16 %v707
  %v712 = vpack.c.b16 %v711, %v710
  %v730 = vunpack.c.l.b16 %v591
  %v731 = vunpack.c.l.b16 %v592
  %v732 = vunpack.c.l.b16 %v593
  %v733 = vunpack.c.l.b16 %v594
  %v734 = vunpack.c.l.b16 %v595
  %v735 = vunpack.c.l.b16 %v596
  %v736 = vunpack.c.l.b16 %v597
  %v737 = vunpack.c.l.b16 %v598
  %v738 = vunpack.c.l.b16 %v599
  %v739 = vunpack.c.l.b16 %v600
  %v740 = vunpack.c.l.b16 %v601
  %v741 = vunpack.c.l.b16 %v602
  %v742 = vunpack.c.l.b16 %v603
  %v743 = vunpack.c.l.b16 %v604
  %v744 = vunpack.c.l.b16 %v605
  %v745 = vunpack.c.l.b16 %v606
  %v746 = vpack.c.b16 %v731, %v730
  %v747 = vpack.c.b16 %v733, %v732
  %v748 = vpack.c.b16 %v735, %v734
  %v749 = vpack.c.b16 %v737, %v736
  %v750 = vpack.c.b16 %v739, %v738
  %v751 = vpack.c.b16 %v741, %v740
  %v752 = vpack.c.b16 %v743, %v742
  %v753 = vpack.c.b16 %v745, %v744
  %762 = vmatprep.subr.bf16.mxu0 0
  %763 = vmatpush1.bf16.xpose.msra.mxu0 %v753
  %764 = vmatprep.subr.bf16.mxu0 0
  %765 = vmatpush1.bf16.xpose.msra.mxu0 %v752
  %766 = vmatprep.subr.bf16.mxu0 0
  %767 = vmatpush1.bf16.xpose.msra.mxu0 %v751
  %768 = vmatprep.subr.bf16.mxu0 0
  %769 = vmatpush1.bf16.xpose.msra.mxu0 %v750
  %770 = vmatprep.subr.bf16.mxu0 0
  %771 = vmatpush1.bf16.xpose.msra.mxu0 %v749
  %772 = vmatprep.subr.bf16.mxu0 0
  %773 = vmatpush1.bf16.xpose.msra.mxu0 %v748
  %774 = vmatprep.subr.bf16.mxu0 0
  %775 = vmatpush1.bf16.xpose.msra.mxu0 %v747
  %776 = vmatprep.subr.bf16.mxu0 0
  %777 = vmatpush1.bf16.xpose.msra.mxu0 %v746
  %778 = vmatprep.subr.bf16.mxu0 0
  %779 = vmatpush2.bf16.xpose.msra.mxu0 0
  %780 = vmatprep.subr.bf16.mxu0 0
  %781 = vmatpush2.bf16.xpose.msra.mxu0 0
  %782 = vmatprep.subr.bf16.mxu0 0
  %783 = vmatpush2.bf16.xpose.msra.mxu0 0
  %784 = vmatprep.subr.bf16.mxu0 0
  %785 = vmatpush2.bf16.xpose.msra.mxu0 0
  %786 = vmatprep.subr.bf16.mxu0 0
  %787 = vmatpush2.bf16.xpose.msra.mxu0 0
  %788 = vmatprep.subr.bf16.mxu0 0
  %789 = vmatpush2.bf16.xpose.msra.mxu0 0
  %790 = vmatprep.subr.bf16.mxu0 0
  %791 = vmatpush2.bf16.xpose.msra.mxu0 0
  %792 = vmatprep.subr.bf16.mxu0 0
  %793 = vmatpush2.bf16.xpose.msra.mxu0 0
  %794 = vmatprep.mubr.bf16.mxu0 0
  %795 = vmatmul.mubr.bf16.gmra.mxu0 %v712
  %v796 = vpop.f32.mrf.mxu0
  %v797 = vadd.f32 0.0, %v796
  %v798 = vpop.f32.mrf.mxu0
  %v799 = vpop.f32.mrf.mxu0
  %v800 = vadd.f32 0.0, %v799
  %v801 = vpop.f32.mrf.mxu0
  %802 = vdwg.mxu0
  %v803 = vmul.f32 %v797, 14.285714
  %v804 = vmul.f32 %v800, 14.285714
  %v805 = vld [vmem:[#allocation7] sm:$0xff]
  %v806 = vld [vmem:[#allocation7 + $0x8] sm:$0xff]
  %807 = vmax.xlane.f32.xlu0 %v704
  %v808 = vpop.xlane.xlu0 %807
  %809 = vmax.xlane.f32.xlu0 %v705
  %v810 = vpop.xlane.xlu0 %809
  %v811 = vmax.f32 %v805, %v808
  %v812 = vmax.f32 %v806, %v810
  %v813 = vld [vmem:[#allocation8] sm:$0xff]
  %v814 = vld [vmem:[#allocation8 + $0x8] sm:$0xff]
  %v815 = vsub.f32 %v805, %v811
  %v816 = vsub.f32 %v806, %v812
  %v817 = vmul.f32 %v815, 1.442695
  %v818 = vpow.pop %v817
  %v819 = vmul.f32 %v816, 1.442695
  %v820 = vpow.pop %v819
  %v821 = vmul.f32 %v813, %v818
  %v822 = vmul.f32 %v814, %v820
  %824 = vset.pattern.permute.xlu0 0
  %825 = vperm.xlu0 %824, %v811
  %v826 = vpop.permute.xlu0 %825
  %829 = vset.pattern.permute.xlu0 0
  %830 = vperm.xlu0 %829, %v812
  %v831 = vpop.permute.xlu0 %830
  %v833 = vsub.f32 %v704, %v826
  %v834 = vsub.f32 %v705, %v831
  %v835 = vmul.f32 %v833, 1.442695
  %v836 = vpow.pop %v835
  %v837 = vmul.f32 %v834, 1.442695
  %v838 = vpow.pop %v837
  %839 = vadd.xlane.f32.xlu0 %v836
  %v840 = vpop.xlane.xlu0 %839
  %841 = vadd.xlane.f32.xlu0 %v838
  %v842 = vpop.xlane.xlu0 %841
  %v843 = vadd.f32 %v821, %v840
  %v844 = vadd.f32 %v822, %v842
  %vm845 = vcmask 7168
  %846 = vst.msk [vmem:[#allocation8] sm:$0xff] %vm845, %v843
  %847 = vst.msk [vmem:[#allocation8 + $0x8] sm:$0xff] %vm845, %v844
  %848 = vst.msk [vmem:[#allocation7] sm:$0xff] %vm845, %v811
  %849 = vst.msk [vmem:[#allocation7 + $0x8] sm:$0xff] %vm845, %v812
  %v850 = vld [vmem:[#allocation9] sm:$0xff]
  %v851 = vld [vmem:[#allocation9 + $0x8] sm:$0xff]
  %852 = vmax.xlane.f32.xlu0 %v803
  %v853 = vpop.xlane.xlu0 %852
  %854 = vmax.xlane.f32.xlu0 %v804
  %v855 = vpop.xlane.xlu0 %854
  %v856 = vmax.f32 %v850, %v853
  %v857 = vmax.f32 %v851, %v855
  %v858 = vld [vmem:[#allocation10] sm:$0xff]
  %v859 = vld [vmem:[#allocation10 + $0x8] sm:$0xff]
  %v860 = vsub.f32 %v850, %v856
  %v861 = vsub.f32 %v851, %v857
  %v862 = vmul.f32 %v860, 1.442695
  %v863 = vpow.pop %v862
  %v864 = vmul.f32 %v861, 1.442695
  %v865 = vpow.pop %v864
  %v866 = vmul.f32 %v858, %v863
  %v867 = vmul.f32 %v859, %v865
  %869 = vset.pattern.permute.xlu0 0
  %870 = vperm.xlu0 %869, %v856
  %v871 = vpop.permute.xlu0 %870
  %874 = vset.pattern.permute.xlu0 0
  %875 = vperm.xlu0 %874, %v857
  %v876 = vpop.permute.xlu0 %875
  %v878 = vsub.f32 %v803, %v871
  %v879 = vsub.f32 %v804, %v876
  %v880 = vmul.f32 %v878, 1.442695
  %v881 = vpow.pop %v880
  %v882 = vmul.f32 %v879, 1.442695
  %v883 = vpow.pop %v882
  %884 = vadd.xlane.f32.xlu0 %v881
  %v885 = vpop.xlane.xlu0 %884
  %886 = vadd.xlane.f32.xlu0 %v883
  %v887 = vpop.xlane.xlu0 %886
  %v888 = vadd.f32 %v866, %v885
  %v889 = vadd.f32 %v867, %v887
  %890 = vst.msk [vmem:[#allocation10] sm:$0xff] %vm845, %v888
  %891 = vst.msk [vmem:[#allocation10 + $0x8] sm:$0xff] %vm845, %v889
  %892 = vst.msk [vmem:[#allocation9] sm:$0xff] %vm845, %v856
  %893 = vst.msk [vmem:[#allocation9 + $0x8] sm:$0xff] %vm845, %v857
  // Predicated region
  $region34: #{dpfm_loss.1} parent=0 // pred_check
    %p894 = pneg %p27
  $region35: #{dpfm_loss.1} parent=0 // pred_check_branch
    %896 = sbr.rel (%p894) target = $region37
  $region36: #{dpfm_loss.1} parent=0 // pred_region
    %v897 = vld [vmem:[#allocation7] sm:$0xff]
    %v898 = vld [vmem:[#allocation7 + $0x8] sm:$0xff]
    %v899 = vld [vmem:[#allocation8] sm:$0xff]
    %v900 = vld [vmem:[#allocation8 + $0x8] sm:$0xff]
    %v901 = vlog2.pop %v899
    %v902 = vmul.f32 %v901, 0.6931472
    %v903 = vlog2.pop %v900
    %v904 = vmul.f32 %v903, 0.6931472
    %v905 = vadd.f32 %v897, %v902
    %v906 = vadd.f32 %v898, %v904
    %v907 = vld [vmem:[#allocation9] sm:$0xff]
    %v908 = vld [vmem:[#allocation9 + $0x8] sm:$0xff]
    %v909 = vld [vmem:[#allocation10] sm:$0xff]
    %v910 = vld [vmem:[#allocation10 + $0x8] sm:$0xff]
    %v911 = vlog2.pop %v909
    %v912 = vmul.f32 %v911, 0.6931472
    %v913 = vlog2.pop %v910
    %v914 = vmul.f32 %v913, 0.6931472
    %v915 = vadd.f32 %v907, %v912
    %v916 = vadd.f32 %v908, %v914
    %v917 = vld [vmem:[#allocation6] sm:$0xff]
    %v918 = vld [vmem:[#allocation6 + $0x8] sm:$0xff]
    %v919 = vsub.f32 %v905, %v917
    %v920 = vsub.f32 %v906, %v918
    %v921 = vsub.f32 %v915, %v917
    %v922 = vsub.f32 %v916, %v918
    %v923 = vadd.f32 %v919, %v921
    %v924 = vadd.f32 %v920, %v922
    %v925 = vsel %vm845, %v923, 0.0
    %v926 = vsel %vm845, %v924, 0.0
    %v927 = vadd.f32 %v925, %v926
    %928 = vadd.xlane.f32.xlu0 %v927
    %v929 = vpop.xlane.xlu0 %928
    %v930 = vrot.slane %v929, 4
    %v931 = vadd.f32 %v929, %v930
    %v932 = vrot.slane %v931, 2
    %v933 = vadd.f32 %v931, %v932
    %v934 = vrot.slane %v933, 1
    %v935 = vadd.f32 %v933, %v934
    %s936 = vtos %v935
    %s937 = smul.f32 %s936, 0.00625
    %v938 = vld [vmem:[%s2] sm:$0xf]
    %v939 = vld [vmem:[%s3] sm:$0xf]
    %v940 = vsub.f32 %v938, %v939
    %v941 = vmul.f32 %v940, %v940
    %v944 = vunpack.c.l.s4 1983009808
    %v945 = vunpack.c.0.s8 %v944
    %v946 = vlaneseq
    %v947 = vshrl.u32 %v946, 7
    %v948 = vsub.s32 %v945, %v947
    %v949 = vrot.slane %v941, %v948
    %v950 = vcombine.high %v949, %v949
    %vm953 = vcmask 1041408
    %v954 = vsel %vm953, %v949, 0.0
    %v955 = vsel %vm953, %v950, 0.0
    %v956 = vadd.f32 %v954, %v955
    %957 = vadd.xlane.f32.xlu0 %v956
    %v958 = vpop.xlane.xlu0 %957
    %v959 = vrot.slane %v958, 4
    %v960 = vadd.f32 %v958, %v959
    %v961 = vrot.slane %v960, 2
    %v962 = vadd.f32 %v960, %v961
    %v963 = vrot.slane %v962, 1
    %v964 = vadd.f32 %v962, %v963
    %s965 = vtos %v964
    %v966 = vrcp.pop 2.0
    %s967 = vtos %v966
    %s968 = smul.f32 %s965, %s967
    %v969 = vld [vmem:[%s4] sm:$0xf]
    %v970 = vmax.f32 %v969, 0.0
    %v971 = vmin.f32 %v970, 1.0
    %v972 = vlog2.pop %v971
    %v973 = vmul.f32 %v972, 0.6931472
    %v974 = vmax.f32 %v973, -100.0
    %v975 = vsub.f32 1.0, %v971
    %v976 = vlog2.pop %v975
    %v977 = vmul.f32 %v976, 0.6931472
    %v978 = vmax.f32 %v977, -100.0
    %v980 = vrot.slane %v974, 6
    %v982 = vmul.f32 %v969, %v980
    %v983 = vsub.f32 1.0, %v969
    %v985 = vrot.slane %v978, 6
    %v987 = vmul.f32 %v983, %v985
    %v988 = vadd.f32 %v982, %v987
    %v989 = vsub.f32 0.0, %v988
    %vm990 = vcmask 1043458
    %v991 = vsel %vm990, %v969, 0.0
    %992 = vadd.xlane.f32.xlu0 %v991
    %v993 = vpop.xlane.xlu0 %992
    %v994 = vrcp.pop 128.0
    %v995 = vmul.f32 %v993, %v994
    %vm996 = vcmp.ge.f32.partialorder %v969, 0.5
    %v997 = vsub.f32 1.0, %v995
    %v998 = vsel %vm996, %v997, %v995
    %v999 = vsel %vm990, %v989, 0.0
    %1000 = vadd.xlane.f32.xlu0 %v999
    %v1001 = vpop.xlane.xlu0 %1000
    %v1002 = vmul.f32 %v1001, %v994
    %v1003 = vmul.f32 %v998, %v989
    %v1004 = vsel %vm990, %v1003, 0.0
    %1005 = vadd.xlane.f32.xlu0 %v1004
    %v1006 = vpop.xlane.xlu0 %1005
    %v1007 = vmul.f32 %v1006, %v994
    %vm1008 = vcmp.lt.f32.partialorder %v993, 0.5
    %vm1009 = vcmp.gt.f32.partialorder %v993, 127.5
    %vm1010 = vmor %vm1008, %vm1009
    %v1011 = vsel %vm1010, %v1002, %v1007
    %v1013 = vrot.slane %v1011, 2
    %vm1015 = vcmask 1024
    %v1016 = vsel %vm1015, %v1013, 0.0
    %1017 = vadd.xlane.f32.xlu0 %v1016
    %v1018 = vpop.xlane.xlu0 %1017
    %v1019 = vrot.slane %v1018, 4
    %v1020 = vadd.f32 %v1018, %v1019
    %v1021 = vrot.slane %v1020, 2
    %v1022 = vadd.f32 %v1020, %v1021
    %v1023 = vrot.slane %v1022, 1
    %v1024 = vadd.f32 %v1022, %v1023
    %s1025 = vtos %v1024
    %v1026 = vlaneseq
    %v1027 = vshrl.u32 %v1026, 7
    %vm1028 = vcmp.eq.s32.totalorder %v1027, 0
    %v1029 = vstv %s937
    %v1030 = vsel %vm1028, %v1029, 0.0
    %vm1031 = vcmp.eq.s32.totalorder %v1027, 1
    %v1032 = vstv %s968
    %v1033 = vsel %vm1031, %v1032, %v1030
    %vm1034 = vcmp.eq.s32.totalorder %v1027, 2
    %v1035 = vstv %s1025
    %v1036 = vsel %vm1034, %v1035, %v1033
    %1037 = vst [vmem:[%s7] sm:$0xff] %v1036
  $region37: #{dpfm_loss.1} parent=0 // pred_fallthru
    _
  // Predicated region
  $region38: #{dpfm_loss.1} parent=0 // pred_check
    _
  $region39: #{dpfm_loss.1} parent=0 // pred_check_branch
    %1039 = sbr.rel (0) target = $region41
  $region40: #{dpfm_loss.1} parent=0 // pred_region
    _
  $region41: #{dpfm_loss.1} parent=0 // pred_fallthru
    _
  // Predicated region
  $region42: #{dpfm_loss.1} parent=0 // pred_check
    _
  $region43: #{dpfm_loss.1} parent=0 // pred_check_branch
    %1041 = sbr.rel (0) target = $region45
  $region44: #{dpfm_loss.1} parent=0 // pred_region
    _
  $region45: #{dpfm_loss.1} parent=0 // pred_fallthru
    _

</llo_original>
